<compile_context>
chip_gen: v5e
topology: v5e:2x2
jax: 0.10.0
libtpu: 0.0.40
codegen_flags: <defaults>
</compile_context>

<pallas_src>
import jax
import jax.numpy as jnp
import numpy as np
from jax.experimental import pallas as pl
from jax.experimental.pallas import tpu as pltpu

HIDDEN = 32
N_HEADS = 4
HEAD_DIM = HIDDEN // N_HEADS
FF_DIM = 64
EPS = 1e-5
NEG_INF = -1e10
INV_SQRT_HD = float(HEAD_DIM) ** -0.5   # compile-time constant score scale


# -------------------- in-kernel helpers --------------------
def _linear(x, w_ref, b_ref):
    return jnp.dot(x, w_ref[...], preferred_element_type=jnp.float32) + b_ref[...]


def _layernorm(x, g_ref, b_ref):
    # single pass: sum and sum-of-squares are independent cross-lane reductions
    d = x.shape[-1]
    s = jnp.sum(x, axis=-1, keepdims=True)
    sq = jnp.sum(x * x, axis=-1, keepdims=True)
    mu = s * (1.0 / d)
    var = sq * (1.0 / d) - mu * mu
    return (x - mu) * jax.lax.rsqrt(var + EPS) * g_ref[...] + b_ref[...]


def _attention(q, k, v, bias, B, Lq, Lk):
    """q: (B*Lq, D), k/v: (B*Lk, D), bias: (B, Lq|1, Lk) additive (0 / -1e10).

    Heads are a short static unroll; each head's score/softmax/AV is batched
    over the batch dim with a single-batch-dim einsum (no per-head mask
    compare, no per-batch grid step).  The score scale is folded into q once.
    """
    q = q * INV_SQRT_HD                              # one (B*Lq, D) multiply
    heads = []
    for h in range(N_HEADS):
        sl = slice(h * HEAD_DIM, (h + 1) * HEAD_DIM)
        qh = q[:, sl].reshape(B, Lq, HEAD_DIM)
        kh = k[:, sl].reshape(B, Lk, HEAD_DIM)
        vh = v[:, sl].reshape(B, Lk, HEAD_DIM)
        e = jnp.einsum('bqd,bkd->bqk', qh, kh,
                       preferred_element_type=jnp.float32) + bias
        m = jnp.max(e, axis=-1, keepdims=True)
        p = jnp.exp(e - m)
        p = p * pl.reciprocal(jnp.sum(p, axis=-1, keepdims=True), approx=True)
        heads.append(jnp.einsum('bqk,bkd->bqd', p, vh,
                                preferred_element_type=jnp.float32))
    o = jnp.concatenate(heads, axis=-1)              # (B, Lq, D)
    return o.reshape(B * Lq, HIDDEN)


# -------------------- the fused kernel --------------------
def decoder_layer_kernel(
    trg_ref, enc_ref, tbias_ref, sbias_ref,
    # self attention: fused qkv projection + output projection
    sa_wqkv, sa_bqkv, sa_wo, sa_bo,
    an_g, an_b,
    # encoder (cross) attention: q projection, fused kv projection, output proj
    ca_wq, ca_bq, ca_wkv, ca_bkv, ca_wo, ca_bo,
    en_g, en_b,
    # position-wise feed-forward
    ff_w1, ff_b1, ff_w2, ff_b2,
    fn_g, fn_b,
    out_ref,
):
    Bb, Lt, D = trg_ref.shape
    _, Ls, _ = enc_ref.shape

    trg = trg_ref[...].reshape(Bb * Lt, D)           # flatten: one (B*L, D) slab
    enc = enc_ref[...].reshape(Bb * Ls, D)
    tbias = tbias_ref[...]                           # (Bb, Lt, Lt) additive bias
    sbias = sbias_ref[...]                           # (Bb, 1,  Ls) additive bias

    # TODO(synk): dropout is identity (inference mode); stochastic dropout
    # would need pltpu.prng_seed / pltpu.prng_random_bits.

    # ---- self attention + residual + layernorm ----
    qkv = _linear(trg, sa_wqkv, sa_bqkv)                         # (B*Lt, 3D)
    attn = _attention(qkv[:, :D], qkv[:, D:2 * D], qkv[:, 2 * D:],
                      tbias, Bb, Lt, Lt)
    attn = _linear(attn, sa_wo, sa_bo)
    x = _layernorm(trg + attn, an_g, an_b)

    # ---- encoder (cross) attention + residual + layernorm ----
    q = _linear(x, ca_wq, ca_bq)                                 # (B*Lt, D)
    kv = _linear(enc, ca_wkv, ca_bkv)                            # (B*Ls, 2D)
    attn = _attention(q, kv[:, :D], kv[:, D:], sbias, Bb, Lt, Ls)
    attn = _linear(attn, ca_wo, ca_bo)
    x = _layernorm(x + attn, en_g, en_b)

    # ---- position-wise feed-forward + residual + layernorm ----
    h = jnp.maximum(_linear(x, ff_w1, ff_b1), 0.0)
    ff = _linear(h, ff_w2, ff_b2)
    x = _layernorm(x + ff, fn_g, fn_b)

    out_ref[...] = x.reshape(Bb, Lt, D).astype(out_ref.dtype)


# -------------------- wrapper --------------------
def decoder_layer(trg, enc_src, trg_mask, src_mask, params, batch_block=None):
    B, Lt, D = trg.shape
    _, Ls, _ = enc_src.shape
    if batch_block is None:
        batch_block = B          # whole batch in one grid step (overhead-bound)
    assert B % batch_block == 0
    n_blocks = B // batch_block  # set batch_block=B//2 on v7x to use both TCs

    (sa_wq, sa_bq, sa_wk, sa_bk, sa_wv, sa_bv, sa_wo, sa_bo,
     an_g, an_b,
     ca_wq, ca_bq, ca_wk, ca_bk, ca_wv, ca_bv, ca_wo, ca_bo,
     en_g, en_b,
     ff_w1, ff_b1, ff_w2, ff_b2,
     fn_g, fn_b) = params

    # Host-side packing: fused QKV (self-attn) and KV (cross-attn) projections.
    sa_wqkv = jnp.concatenate([sa_wq, sa_wk, sa_wv], axis=1)     # (D, 3D)
    sa_bqkv = jnp.concatenate([sa_bq, sa_bk, sa_bv], axis=1)     # (1, 3D)
    ca_wkv = jnp.concatenate([ca_wk, ca_wv], axis=1)             # (D, 2D)
    ca_bkv = jnp.concatenate([ca_bk, ca_bv], axis=1)             # (1, 2D)

    kernel_params = [sa_wqkv, sa_bqkv, sa_wo, sa_bo, an_g, an_b,
                     ca_wq, ca_bq, ca_wkv, ca_bkv, ca_wo, ca_bo, en_g, en_b,
                     ff_w1, ff_b1, ff_w2, ff_b2, fn_g, fn_b]

    # Additive mask biases (0 keep / -1e10 masked): hoists the compare/select
    # out of the kernel's per-head softmax path.
    tbias = jnp.where(trg_mask == 0, NEG_INF, 0.0).astype(jnp.float32)
    sbias = jnp.where(src_mask == 0, NEG_INF, 0.0).astype(jnp.float32)

    def batch_spec(shape):
        blk = (batch_block,) + tuple(shape[1:])
        n = len(shape)
        return pl.BlockSpec(blk, lambda b, _n=n: (b,) + (0,) * (_n - 1))

    def param_spec(shape):
        n = len(shape)
        return pl.BlockSpec(tuple(shape), lambda b, _n=n: (0,) * _n)

    data = [trg, enc_src, tbias, sbias]
    in_specs = ([batch_spec(a.shape) for a in data]
                + [param_spec(p.shape) for p in kernel_params])

    return pl.pallas_call(
        decoder_layer_kernel,
        out_shape=jax.ShapeDtypeStruct((B, Lt, D), jnp.float32),
        grid_spec=pltpu.PrefetchScalarGridSpec(
            num_scalar_prefetch=0,
            grid=(n_blocks,),
            in_specs=in_specs,
            out_specs=batch_spec((B, Lt, D)),
        ),
        compiler_params=pltpu.CompilerParams(
            dimension_semantics=("parallel",)),
    )(*data, *kernel_params)


# -------------------- deterministic parameter init --------------------
def init_params(key):
    keys = iter(jax.random.split(key, 26))

    def nrm(shape, scale):
        return jax.random.normal(next(keys), shape, jnp.float32) * scale

    def lin(din, dout):
        # weight stored as (in, out) so y = x @ W + b
        return [nrm((din, dout), 0.05), nrm((1, dout), 0.02)]

    params = []
    for _ in range(4):                       # self-attn q, k, v, o
        params += lin(HIDDEN, HIDDEN)
    params += [1.0 + nrm((1, HIDDEN), 0.01), nrm((1, HIDDEN), 0.01)]   # attention_norm
    for _ in range(4):                       # encoder-attn q, k, v, o
        params += lin(HIDDEN, HIDDEN)
    params += [1.0 + nrm((1, HIDDEN), 0.01), nrm((1, HIDDEN), 0.01)]   # encoder_norm
    params += lin(HIDDEN, FF_DIM)            # FF fc1
    params += lin(FF_DIM, HIDDEN)            # FF fc2
    params += [1.0 + nrm((1, HIDDEN), 0.01), nrm((1, HIDDEN), 0.01)]   # FF_norm
    return params


# -------------------- pure-JAX reference (for verification) --------------------
def ref_forward(trg, enc, tmask, smask, params):
    (sa_wq, sa_bq, sa_wk, sa_bk, sa_wv, sa_bv, sa_wo, sa_bo,
     an_g, an_b,
     ca_wq, ca_bq, ca_wk, ca_bk, ca_wv, ca_bv, ca_wo, ca_bo,
     en_g, en_b,
     ff_w1, ff_b1, ff_w2, ff_b2,
     fn_g, fn_b) = params

    def linear(x, w, b):
        return x @ w + b

    def ln(x, g, b):
        mu = x.mean(-1, keepdims=True)
        var = ((x - mu) ** 2).mean(-1, keepdims=True)
        return (x - mu) / jnp.sqrt(var + EPS) * g + b

    def mha(qi, kvi, mask, wq, bq, wk, bk, wv, bv, wo, bo):
        Lq, Lk = qi.shape[0], kvi.shape[0]
        q = linear(qi, wq, bq).reshape(Lq, N_HEADS, HEAD_DIM).transpose(1, 0, 2)
        k = linear(kvi, wk, bk).reshape(Lk, N_HEADS, HEAD_DIM).transpose(1, 0, 2)
        v = linear(kvi, wv, bv).reshape(Lk, N_HEADS, HEAD_DIM).transpose(1, 0, 2)
        e = q @ k.transpose(0, 2, 1) / jnp.sqrt(jnp.float32(HEAD_DIM))
        e = jnp.where(mask[None] == 0, NEG_INF, e)
        a = jax.nn.softmax(e, axis=-1)
        o = (a @ v).transpose(1, 0, 2).reshape(Lq, HIDDEN)
        return linear(o, wo, bo)

    def single(t, e_, tm, sm):
        a = mha(t, t, tm, sa_wq, sa_bq, sa_wk, sa_bk, sa_wv, sa_bv, sa_wo, sa_bo)
        x = ln(t + a, an_g, an_b)
        a = mha(x, e_, sm, ca_wq, ca_bq, ca_wk, ca_bk, ca_wv, ca_bv, ca_wo, ca_bo)
        x = ln(x + a, en_g, en_b)
        h = jax.nn.relu(linear(x, ff_w1, ff_b1))
        f = linear(h, ff_w2, ff_b2)
        return ln(x + f, fn_g, fn_b)

    return jax.vmap(single)(trg, enc, tmask, smask)


# -------------------- main --------------------
if __name__ == "__main__":
    key = jax.random.PRNGKey(0)
    kp, kt, ke = jax.random.split(key, 3)

    B, Lt, Ls = 2, 8, 8
    params = init_params(kp)
    trg = jax.random.normal(kt, (B, Lt, HIDDEN), jnp.float32)
    enc_src = jax.random.normal(ke, (B, Ls, HIDDEN), jnp.float32)

    # causal target mask; source mask pads out last 2 keys of example 1
    trg_mask = jnp.tile(jnp.tril(jnp.ones((Lt, Lt), jnp.float32))[None], (B, 1, 1))
    src_mask = jnp.ones((B, 1, Ls), jnp.float32)
    src_mask = src_mask.at[1, 0, Ls - 2:].set(0.0)

    out = decoder_layer(trg, enc_src, trg_mask, src_mask, params)
    out = jax.block_until_ready(out)

    ref = ref_forward(trg, enc_src, trg_mask, src_mask, params)
    # tolerance accommodates the approximate EUP reciprocal in the softmax
    np.testing.assert_allclose(np.asarray(out), np.asarray(ref),
                               rtol=2e-3, atol=2e-3)
    print("KERNEL_OK")
</pallas_src>

<mosaic_0001>
module attributes {stable_mosaic.version = 11 : i64} {
  func.func @decoder_layer_kernel(%arg0: i32, %arg1: memref<2x8x32xf32, #tpu.memory_space<vmem>>, %arg2: memref<2x8x32xf32, #tpu.memory_space<vmem>>, %arg3: memref<2x8x8xf32, #tpu.memory_space<vmem>>, %arg4: memref<2x1x8xf32, #tpu.memory_space<vmem>>, %arg5: memref<32x96xf32, #tpu.memory_space<vmem>>, %arg6: memref<1x96xf32, #tpu.memory_space<vmem>>, %arg7: memref<32x32xf32, #tpu.memory_space<vmem>>, %arg8: memref<1x32xf32, #tpu.memory_space<vmem>>, %arg9: memref<1x32xf32, #tpu.memory_space<vmem>>, %arg10: memref<1x32xf32, #tpu.memory_space<vmem>>, %arg11: memref<32x32xf32, #tpu.memory_space<vmem>>, %arg12: memref<1x32xf32, #tpu.memory_space<vmem>>, %arg13: memref<32x64xf32, #tpu.memory_space<vmem>>, %arg14: memref<1x64xf32, #tpu.memory_space<vmem>>, %arg15: memref<32x32xf32, #tpu.memory_space<vmem>>, %arg16: memref<1x32xf32, #tpu.memory_space<vmem>>, %arg17: memref<1x32xf32, #tpu.memory_space<vmem>>, %arg18: memref<1x32xf32, #tpu.memory_space<vmem>>, %arg19: memref<32x64xf32, #tpu.memory_space<vmem>>, %arg20: memref<1x64xf32, #tpu.memory_space<vmem>>, %arg21: memref<64x32xf32, #tpu.memory_space<vmem>>, %arg22: memref<1x32xf32, #tpu.memory_space<vmem>>, %arg23: memref<1x32xf32, #tpu.memory_space<vmem>>, %arg24: memref<1x32xf32, #tpu.memory_space<vmem>>, %arg25: memref<2x8x32xf32, #tpu.memory_space<vmem>>) attributes {dimension_semantics = [#tpu.dimension_semantics<parallel>], iteration_bounds = array<i64: 1>, scalar_prefetch = 0 : i64, scratch_operands = 0 : i64, tpu.core_type = #tpu.core_type<tc>, window_params = [{transform_indices = @transform_0, window_bounds = array<i64: 2, 8, 32>}, {transform_indices = @transform_1, window_bounds = array<i64: 2, 8, 32>}, {transform_indices = @transform_2, window_bounds = array<i64: 2, 8, 8>}, {transform_indices = @transform_3, window_bounds = array<i64: 2, 1, 8>}, {pipeline_mode = #tpu.pipeline_mode<synchronous>, transform_indices = @transform_4, window_bounds = array<i64: 32, 96>}, {pipeline_mode = #tpu.pipeline_mode<synchronous>, transform_indices = @transform_5, window_bounds = array<i64: 1, 96>}, {pipeline_mode = #tpu.pipeline_mode<synchronous>, transform_indices = @transform_6, window_bounds = array<i64: 32, 32>}, {pipeline_mode = #tpu.pipeline_mode<synchronous>, transform_indices = @transform_7, window_bounds = array<i64: 1, 32>}, {pipeline_mode = #tpu.pipeline_mode<synchronous>, transform_indices = @transform_8, window_bounds = array<i64: 1, 32>}, {pipeline_mode = #tpu.pipeline_mode<synchronous>, transform_indices = @transform_9, window_bounds = array<i64: 1, 32>}, {pipeline_mode = #tpu.pipeline_mode<synchronous>, transform_indices = @transform_10, window_bounds = array<i64: 32, 32>}, {pipeline_mode = #tpu.pipeline_mode<synchronous>, transform_indices = @transform_11, window_bounds = array<i64: 1, 32>}, {pipeline_mode = #tpu.pipeline_mode<synchronous>, transform_indices = @transform_12, window_bounds = array<i64: 32, 64>}, {pipeline_mode = #tpu.pipeline_mode<synchronous>, transform_indices = @transform_13, window_bounds = array<i64: 1, 64>}, {pipeline_mode = #tpu.pipeline_mode<synchronous>, transform_indices = @transform_14, window_bounds = array<i64: 32, 32>}, {pipeline_mode = #tpu.pipeline_mode<synchronous>, transform_indices = @transform_15, window_bounds = array<i64: 1, 32>}, {pipeline_mode = #tpu.pipeline_mode<synchronous>, transform_indices = @transform_16, window_bounds = array<i64: 1, 32>}, {pipeline_mode = #tpu.pipeline_mode<synchronous>, transform_indices = @transform_17, window_bounds = array<i64: 1, 32>}, {pipeline_mode = #tpu.pipeline_mode<synchronous>, transform_indices = @transform_18, window_bounds = array<i64: 32, 64>}, {pipeline_mode = #tpu.pipeline_mode<synchronous>, transform_indices = @transform_19, window_bounds = array<i64: 1, 64>}, {pipeline_mode = #tpu.pipeline_mode<synchronous>, transform_indices = @transform_20, window_bounds = array<i64: 64, 32>}, {pipeline_mode = #tpu.pipeline_mode<synchronous>, transform_indices = @transform_21, window_bounds = array<i64: 1, 32>}, {pipeline_mode = #tpu.pipeline_mode<synchronous>, transform_indices = @transform_22, window_bounds = array<i64: 1, 32>}, {pipeline_mode = #tpu.pipeline_mode<synchronous>, transform_indices = @transform_23, window_bounds = array<i64: 1, 32>}, {transform_indices = @transform_24, window_bounds = array<i64: 2, 8, 32>}]} {
    %c0 = arith.constant 0 : index
    %c0_0 = arith.constant 0 : index
    %c0_1 = arith.constant 0 : index
    %0 = vector.load %arg1[%c0, %c0_0, %c0_1] : memref<2x8x32xf32, #tpu.memory_space<vmem>>, vector<2x8x32xf32>
    %1 = vector.shape_cast %0 : vector<2x8x32xf32> to vector<16x32xf32>
    %c0_2 = arith.constant 0 : index
    %c0_3 = arith.constant 0 : index
    %c0_4 = arith.constant 0 : index
    %2 = vector.load %arg2[%c0_2, %c0_3, %c0_4] : memref<2x8x32xf32, #tpu.memory_space<vmem>>, vector<2x8x32xf32>
    %3 = vector.shape_cast %2 : vector<2x8x32xf32> to vector<16x32xf32>
    %c0_5 = arith.constant 0 : index
    %c0_6 = arith.constant 0 : index
    %c0_7 = arith.constant 0 : index
    %4 = vector.load %arg3[%c0_5, %c0_6, %c0_7] : memref<2x8x8xf32, #tpu.memory_space<vmem>>, vector<2x8x8xf32>
    %c0_8 = arith.constant 0 : index
    %c0_9 = arith.constant 0 : index
    %c0_10 = arith.constant 0 : index
    %5 = vector.load %arg4[%c0_8, %c0_9, %c0_10] : memref<2x1x8xf32, #tpu.memory_space<vmem>>, vector<2x1x8xf32>
    %c0_11 = arith.constant 0 : index
    %c0_12 = arith.constant 0 : index
    %6 = vector.load %arg5[%c0_11, %c0_12] : memref<32x96xf32, #tpu.memory_space<vmem>>, vector<32x96xf32>
    %cst = arith.constant dense<0.000000e+00> : vector<16x96xf32>
    %7 = tpu.matmul %1, %6, %cst {dimension_numbers = #tpu.dot_dimension_numbers<[1], [0], [0], [1], [0, 0, 1, 1], [], []>} : vector<16x32xf32>, vector<32x96xf32>, vector<16x96xf32> -> vector<16x96xf32>
    %c0_13 = arith.constant 0 : index
    %c0_14 = arith.constant 0 : index
    %8 = vector.load %arg6[%c0_13, %c0_14] : memref<1x96xf32, #tpu.memory_space<vmem>>, vector<1x96xf32>
    %9 = vector.broadcast %8 : vector<1x96xf32> to vector<16x96xf32>
    %10 = arith.addf %7, %9 : vector<16x96xf32>
    %11 = vector.extract_strided_slice %10 {offsets = [0, 0], sizes = [16, 32], strides = [1, 1]} : vector<16x96xf32> to vector<16x32xf32>
    %12 = vector.extract_strided_slice %10 {offsets = [0, 32], sizes = [16, 32], strides = [1, 1]} : vector<16x96xf32> to vector<16x32xf32>
    %13 = vector.extract_strided_slice %10 {offsets = [0, 64], sizes = [16, 32], strides = [1, 1]} : vector<16x96xf32> to vector<16x32xf32>
    %cst_15 = arith.constant 0.353553385 : f32
    %14 = vector.broadcast %cst_15 : f32 to vector<16x32xf32>
    %15 = arith.mulf %11, %14 : vector<16x32xf32>
    %16 = vector.extract_strided_slice %15 {offsets = [0, 0], sizes = [16, 8], strides = [1, 1]} : vector<16x32xf32> to vector<16x8xf32>
    %17 = vector.shape_cast %16 : vector<16x8xf32> to vector<2x8x8xf32>
    %18 = vector.extract_strided_slice %12 {offsets = [0, 0], sizes = [16, 8], strides = [1, 1]} : vector<16x32xf32> to vector<16x8xf32>
    %19 = vector.shape_cast %18 : vector<16x8xf32> to vector<2x8x8xf32>
    %20 = vector.extract_strided_slice %13 {offsets = [0, 0], sizes = [16, 8], strides = [1, 1]} : vector<16x32xf32> to vector<16x8xf32>
    %21 = vector.shape_cast %20 : vector<16x8xf32> to vector<2x8x8xf32>
    "tpu.trace_start"() <{level = 10 : i32, message = "bqd,bkd->bqk"}> : () -> ()
    %cst_16 = arith.constant dense<0.000000e+00> : vector<2x8x8xf32>
    %22 = tpu.matmul %17, %19, %cst_16 {dimension_numbers = #tpu.dot_dimension_numbers<[2], [2], [1], [1], [0, 0, 0, 1, 1, 1], [0], [0]>} : vector<2x8x8xf32>, vector<2x8x8xf32>, vector<2x8x8xf32> -> vector<2x8x8xf32>
    "tpu.trace_stop"() : () -> ()
    %23 = arith.addf %22, %4 : vector<2x8x8xf32>
    %cst_17 = arith.constant dense<0xFF800000> : vector<2x8xf32>
    %24 = vector.multi_reduction <maximumf>, %23, %cst_17 [2] : vector<2x8x8xf32> to vector<2x8xf32>
    %25 = vector.shape_cast %24 : vector<2x8xf32> to vector<2x8x1xf32>
    %26 = vector.broadcast %25 : vector<2x8x1xf32> to vector<2x8x8xf32>
    %27 = arith.subf %23, %26 : vector<2x8x8xf32>
    %28 = math.exp %27 : vector<2x8x8xf32>
    %cst_18 = arith.constant dense<0.000000e+00> : vector<2x8xf32>
    %29 = vector.multi_reduction <add>, %28, %cst_18 [2] : vector<2x8x8xf32> to vector<2x8xf32>
    %30 = vector.shape_cast %29 : vector<2x8xf32> to vector<2x8x1xf32>
    %31 = tpu.reciprocal %30 {approx = true} : vector<2x8x1xf32> -> vector<2x8x1xf32>
    %32 = vector.broadcast %31 : vector<2x8x1xf32> to vector<2x8x8xf32>
    %33 = arith.mulf %28, %32 : vector<2x8x8xf32>
    "tpu.trace_start"() <{level = 10 : i32, message = "bqk,bkd->bqd"}> : () -> ()
    %cst_19 = arith.constant dense<0.000000e+00> : vector<2x8x8xf32>
    %34 = tpu.matmul %33, %21, %cst_19 {dimension_numbers = #tpu.dot_dimension_numbers<[2], [1], [1], [2], [0, 0, 0, 1, 1, 2], [0], [0]>} : vector<2x8x8xf32>, vector<2x8x8xf32>, vector<2x8x8xf32> -> vector<2x8x8xf32>
    "tpu.trace_stop"() : () -> ()
    %35 = vector.extract_strided_slice %15 {offsets = [0, 8], sizes = [16, 8], strides = [1, 1]} : vector<16x32xf32> to vector<16x8xf32>
    %36 = vector.shape_cast %35 : vector<16x8xf32> to vector<2x8x8xf32>
    %37 = vector.extract_strided_slice %12 {offsets = [0, 8], sizes = [16, 8], strides = [1, 1]} : vector<16x32xf32> to vector<16x8xf32>
    %38 = vector.shape_cast %37 : vector<16x8xf32> to vector<2x8x8xf32>
    %39 = vector.extract_strided_slice %13 {offsets = [0, 8], sizes = [16, 8], strides = [1, 1]} : vector<16x32xf32> to vector<16x8xf32>
    %40 = vector.shape_cast %39 : vector<16x8xf32> to vector<2x8x8xf32>
    "tpu.trace_start"() <{level = 10 : i32, message = "bqd,bkd->bqk"}> : () -> ()
    %cst_20 = arith.constant dense<0.000000e+00> : vector<2x8x8xf32>
    %41 = tpu.matmul %36, %38, %cst_20 {dimension_numbers = #tpu.dot_dimension_numbers<[2], [2], [1], [1], [0, 0, 0, 1, 1, 1], [0], [0]>} : vector<2x8x8xf32>, vector<2x8x8xf32>, vector<2x8x8xf32> -> vector<2x8x8xf32>
    "tpu.trace_stop"() : () -> ()
    %42 = arith.addf %41, %4 : vector<2x8x8xf32>
    %cst_21 = arith.constant dense<0xFF800000> : vector<2x8xf32>
    %43 = vector.multi_reduction <maximumf>, %42, %cst_21 [2] : vector<2x8x8xf32> to vector<2x8xf32>
    %44 = vector.shape_cast %43 : vector<2x8xf32> to vector<2x8x1xf32>
    %45 = vector.broadcast %44 : vector<2x8x1xf32> to vector<2x8x8xf32>
    %46 = arith.subf %42, %45 : vector<2x8x8xf32>
    %47 = math.exp %46 : vector<2x8x8xf32>
    %cst_22 = arith.constant dense<0.000000e+00> : vector<2x8xf32>
    %48 = vector.multi_reduction <add>, %47, %cst_22 [2] : vector<2x8x8xf32> to vector<2x8xf32>
    %49 = vector.shape_cast %48 : vector<2x8xf32> to vector<2x8x1xf32>
    %50 = tpu.reciprocal %49 {approx = true} : vector<2x8x1xf32> -> vector<2x8x1xf32>
    %51 = vector.broadcast %50 : vector<2x8x1xf32> to vector<2x8x8xf32>
    %52 = arith.mulf %47, %51 : vector<2x8x8xf32>
    "tpu.trace_start"() <{level = 10 : i32, message = "bqk,bkd->bqd"}> : () -> ()
    %cst_23 = arith.constant dense<0.000000e+00> : vector<2x8x8xf32>
    %53 = tpu.matmul %52, %40, %cst_23 {dimension_numbers = #tpu.dot_dimension_numbers<[2], [1], [1], [2], [0, 0, 0, 1, 1, 2], [0], [0]>} : vector<2x8x8xf32>, vector<2x8x8xf32>, vector<2x8x8xf32> -> vector<2x8x8xf32>
    "tpu.trace_stop"() : () -> ()
    %54 = vector.extract_strided_slice %15 {offsets = [0, 16], sizes = [16, 8], strides = [1, 1]} : vector<16x32xf32> to vector<16x8xf32>
    %55 = vector.shape_cast %54 : vector<16x8xf32> to vector<2x8x8xf32>
    %56 = vector.extract_strided_slice %12 {offsets = [0, 16], sizes = [16, 8], strides = [1, 1]} : vector<16x32xf32> to vector<16x8xf32>
    %57 = vector.shape_cast %56 : vector<16x8xf32> to vector<2x8x8xf32>
    %58 = vector.extract_strided_slice %13 {offsets = [0, 16], sizes = [16, 8], strides = [1, 1]} : vector<16x32xf32> to vector<16x8xf32>
    %59 = vector.shape_cast %58 : vector<16x8xf32> to vector<2x8x8xf32>
    "tpu.trace_start"() <{level = 10 : i32, message = "bqd,bkd->bqk"}> : () -> ()
    %cst_24 = arith.constant dense<0.000000e+00> : vector<2x8x8xf32>
    %60 = tpu.matmul %55, %57, %cst_24 {dimension_numbers = #tpu.dot_dimension_numbers<[2], [2], [1], [1], [0, 0, 0, 1, 1, 1], [0], [0]>} : vector<2x8x8xf32>, vector<2x8x8xf32>, vector<2x8x8xf32> -> vector<2x8x8xf32>
    "tpu.trace_stop"() : () -> ()
    %61 = arith.addf %60, %4 : vector<2x8x8xf32>
    %cst_25 = arith.constant dense<0xFF800000> : vector<2x8xf32>
    %62 = vector.multi_reduction <maximumf>, %61, %cst_25 [2] : vector<2x8x8xf32> to vector<2x8xf32>
    %63 = vector.shape_cast %62 : vector<2x8xf32> to vector<2x8x1xf32>
    %64 = vector.broadcast %63 : vector<2x8x1xf32> to vector<2x8x8xf32>
    %65 = arith.subf %61, %64 : vector<2x8x8xf32>
    %66 = math.exp %65 : vector<2x8x8xf32>
    %cst_26 = arith.constant dense<0.000000e+00> : vector<2x8xf32>
    %67 = vector.multi_reduction <add>, %66, %cst_26 [2] : vector<2x8x8xf32> to vector<2x8xf32>
    %68 = vector.shape_cast %67 : vector<2x8xf32> to vector<2x8x1xf32>
    %69 = tpu.reciprocal %68 {approx = true} : vector<2x8x1xf32> -> vector<2x8x1xf32>
    %70 = vector.broadcast %69 : vector<2x8x1xf32> to vector<2x8x8xf32>
    %71 = arith.mulf %66, %70 : vector<2x8x8xf32>
    "tpu.trace_start"() <{level = 10 : i32, message = "bqk,bkd->bqd"}> : () -> ()
    %cst_27 = arith.constant dense<0.000000e+00> : vector<2x8x8xf32>
    %72 = tpu.matmul %71, %59, %cst_27 {dimension_numbers = #tpu.dot_dimension_numbers<[2], [1], [1], [2], [0, 0, 0, 1, 1, 2], [0], [0]>} : vector<2x8x8xf32>, vector<2x8x8xf32>, vector<2x8x8xf32> -> vector<2x8x8xf32>
    "tpu.trace_stop"() : () -> ()
    %73 = vector.extract_strided_slice %15 {offsets = [0, 24], sizes = [16, 8], strides = [1, 1]} : vector<16x32xf32> to vector<16x8xf32>
    %74 = vector.shape_cast %73 : vector<16x8xf32> to vector<2x8x8xf32>
    %75 = vector.extract_strided_slice %12 {offsets = [0, 24], sizes = [16, 8], strides = [1, 1]} : vector<16x32xf32> to vector<16x8xf32>
    %76 = vector.shape_cast %75 : vector<16x8xf32> to vector<2x8x8xf32>
    %77 = vector.extract_strided_slice %13 {offsets = [0, 24], sizes = [16, 8], strides = [1, 1]} : vector<16x32xf32> to vector<16x8xf32>
    %78 = vector.shape_cast %77 : vector<16x8xf32> to vector<2x8x8xf32>
    "tpu.trace_start"() <{level = 10 : i32, message = "bqd,bkd->bqk"}> : () -> ()
    %cst_28 = arith.constant dense<0.000000e+00> : vector<2x8x8xf32>
    %79 = tpu.matmul %74, %76, %cst_28 {dimension_numbers = #tpu.dot_dimension_numbers<[2], [2], [1], [1], [0, 0, 0, 1, 1, 1], [0], [0]>} : vector<2x8x8xf32>, vector<2x8x8xf32>, vector<2x8x8xf32> -> vector<2x8x8xf32>
    "tpu.trace_stop"() : () -> ()
    %80 = arith.addf %79, %4 : vector<2x8x8xf32>
    %cst_29 = arith.constant dense<0xFF800000> : vector<2x8xf32>
    %81 = vector.multi_reduction <maximumf>, %80, %cst_29 [2] : vector<2x8x8xf32> to vector<2x8xf32>
    %82 = vector.shape_cast %81 : vector<2x8xf32> to vector<2x8x1xf32>
    %83 = vector.broadcast %82 : vector<2x8x1xf32> to vector<2x8x8xf32>
    %84 = arith.subf %80, %83 : vector<2x8x8xf32>
    %85 = math.exp %84 : vector<2x8x8xf32>
    %cst_30 = arith.constant dense<0.000000e+00> : vector<2x8xf32>
    %86 = vector.multi_reduction <add>, %85, %cst_30 [2] : vector<2x8x8xf32> to vector<2x8xf32>
    %87 = vector.shape_cast %86 : vector<2x8xf32> to vector<2x8x1xf32>
    %88 = tpu.reciprocal %87 {approx = true} : vector<2x8x1xf32> -> vector<2x8x1xf32>
    %89 = vector.broadcast %88 : vector<2x8x1xf32> to vector<2x8x8xf32>
    %90 = arith.mulf %85, %89 : vector<2x8x8xf32>
    "tpu.trace_start"() <{level = 10 : i32, message = "bqk,bkd->bqd"}> : () -> ()
    %cst_31 = arith.constant dense<0.000000e+00> : vector<2x8x8xf32>
    %91 = tpu.matmul %90, %78, %cst_31 {dimension_numbers = #tpu.dot_dimension_numbers<[2], [1], [1], [2], [0, 0, 0, 1, 1, 2], [0], [0]>} : vector<2x8x8xf32>, vector<2x8x8xf32>, vector<2x8x8xf32> -> vector<2x8x8xf32>
    "tpu.trace_stop"() : () -> ()
    %92 = tpu.concatenate %34, %53, %72, %91 in 2 : vector<2x8x8xf32>, vector<2x8x8xf32>, vector<2x8x8xf32>, vector<2x8x8xf32> -> vector<2x8x32xf32>
    %93 = vector.shape_cast %92 : vector<2x8x32xf32> to vector<16x32xf32>
    %c0_32 = arith.constant 0 : index
    %c0_33 = arith.constant 0 : index
    %94 = vector.load %arg7[%c0_32, %c0_33] : memref<32x32xf32, #tpu.memory_space<vmem>>, vector<32x32xf32>
    %cst_34 = arith.constant dense<0.000000e+00> : vector<16x32xf32>
    %95 = tpu.matmul %93, %94, %cst_34 {dimension_numbers = #tpu.dot_dimension_numbers<[1], [0], [0], [1], [0, 0, 1, 1], [], []>} : vector<16x32xf32>, vector<32x32xf32>, vector<16x32xf32> -> vector<16x32xf32>
    %c0_35 = arith.constant 0 : index
    %c0_36 = arith.constant 0 : index
    %96 = vector.load %arg8[%c0_35, %c0_36] : memref<1x32xf32, #tpu.memory_space<vmem>>, vector<1x32xf32>
    %97 = vector.broadcast %96 : vector<1x32xf32> to vector<16x32xf32>
    %98 = arith.addf %95, %97 : vector<16x32xf32>
    %99 = arith.addf %1, %98 : vector<16x32xf32>
    %cst_37 = arith.constant dense<0.000000e+00> : vector<16xf32>
    %100 = vector.multi_reduction <add>, %99, %cst_37 [1] : vector<16x32xf32> to vector<16xf32>
    %101 = vector.shape_cast %100 : vector<16xf32> to vector<16x1xf32>
    %102 = arith.mulf %99, %99 : vector<16x32xf32>
    %cst_38 = arith.constant dense<0.000000e+00> : vector<16xf32>
    %103 = vector.multi_reduction <add>, %102, %cst_38 [1] : vector<16x32xf32> to vector<16xf32>
    %104 = vector.shape_cast %103 : vector<16xf32> to vector<16x1xf32>
    %cst_39 = arith.constant 3.125000e-02 : f32
    %105 = vector.broadcast %cst_39 : f32 to vector<16x1xf32>
    %106 = arith.mulf %101, %105 : vector<16x1xf32>
    %cst_40 = arith.constant 3.125000e-02 : f32
    %107 = vector.broadcast %cst_40 : f32 to vector<16x1xf32>
    %108 = arith.mulf %104, %107 : vector<16x1xf32>
    %109 = arith.mulf %106, %106 : vector<16x1xf32>
    %110 = arith.subf %108, %109 : vector<16x1xf32>
    %111 = vector.broadcast %106 : vector<16x1xf32> to vector<16x32xf32>
    %112 = arith.subf %99, %111 : vector<16x32xf32>
    %cst_41 = arith.constant 9.99999974E-6 : f32
    %113 = vector.broadcast %cst_41 : f32 to vector<16x1xf32>
    %114 = arith.addf %110, %113 : vector<16x1xf32>
    %115 = math.rsqrt %114 : vector<16x1xf32>
    %116 = vector.broadcast %115 : vector<16x1xf32> to vector<16x32xf32>
    %117 = arith.mulf %112, %116 : vector<16x32xf32>
    %c0_42 = arith.constant 0 : index
    %c0_43 = arith.constant 0 : index
    %118 = vector.load %arg9[%c0_42, %c0_43] : memref<1x32xf32, #tpu.memory_space<vmem>>, vector<1x32xf32>
    %119 = vector.broadcast %118 : vector<1x32xf32> to vector<16x32xf32>
    %120 = arith.mulf %117, %119 : vector<16x32xf32>
    %c0_44 = arith.constant 0 : index
    %c0_45 = arith.constant 0 : index
    %121 = vector.load %arg10[%c0_44, %c0_45] : memref<1x32xf32, #tpu.memory_space<vmem>>, vector<1x32xf32>
    %122 = vector.broadcast %121 : vector<1x32xf32> to vector<16x32xf32>
    %123 = arith.addf %120, %122 : vector<16x32xf32>
    %c0_46 = arith.constant 0 : index
    %c0_47 = arith.constant 0 : index
    %124 = vector.load %arg11[%c0_46, %c0_47] : memref<32x32xf32, #tpu.memory_space<vmem>>, vector<32x32xf32>
    %cst_48 = arith.constant dense<0.000000e+00> : vector<16x32xf32>
    %125 = tpu.matmul %123, %124, %cst_48 {dimension_numbers = #tpu.dot_dimension_numbers<[1], [0], [0], [1], [0, 0, 1, 1], [], []>} : vector<16x32xf32>, vector<32x32xf32>, vector<16x32xf32> -> vector<16x32xf32>
    %c0_49 = arith.constant 0 : index
    %c0_50 = arith.constant 0 : index
    %126 = vector.load %arg12[%c0_49, %c0_50] : memref<1x32xf32, #tpu.memory_space<vmem>>, vector<1x32xf32>
    %127 = vector.broadcast %126 : vector<1x32xf32> to vector<16x32xf32>
    %128 = arith.addf %125, %127 : vector<16x32xf32>
    %c0_51 = arith.constant 0 : index
    %c0_52 = arith.constant 0 : index
    %129 = vector.load %arg13[%c0_51, %c0_52] : memref<32x64xf32, #tpu.memory_space<vmem>>, vector<32x64xf32>
    %cst_53 = arith.constant dense<0.000000e+00> : vector<16x64xf32>
    %130 = tpu.matmul %3, %129, %cst_53 {dimension_numbers = #tpu.dot_dimension_numbers<[1], [0], [0], [1], [0, 0, 1, 1], [], []>} : vector<16x32xf32>, vector<32x64xf32>, vector<16x64xf32> -> vector<16x64xf32>
    %c0_54 = arith.constant 0 : index
    %c0_55 = arith.constant 0 : index
    %131 = vector.load %arg14[%c0_54, %c0_55] : memref<1x64xf32, #tpu.memory_space<vmem>>, vector<1x64xf32>
    %132 = vector.broadcast %131 : vector<1x64xf32> to vector<16x64xf32>
    %133 = arith.addf %130, %132 : vector<16x64xf32>
    %134 = vector.extract_strided_slice %133 {offsets = [0, 0], sizes = [16, 32], strides = [1, 1]} : vector<16x64xf32> to vector<16x32xf32>
    %135 = vector.extract_strided_slice %133 {offsets = [0, 32], sizes = [16, 32], strides = [1, 1]} : vector<16x64xf32> to vector<16x32xf32>
    %cst_56 = arith.constant 0.353553385 : f32
    %136 = vector.broadcast %cst_56 : f32 to vector<16x32xf32>
    %137 = arith.mulf %128, %136 : vector<16x32xf32>
    %138 = vector.extract_strided_slice %137 {offsets = [0, 0], sizes = [16, 8], strides = [1, 1]} : vector<16x32xf32> to vector<16x8xf32>
    %139 = vector.shape_cast %138 : vector<16x8xf32> to vector<2x8x8xf32>
    %140 = vector.extract_strided_slice %134 {offsets = [0, 0], sizes = [16, 8], strides = [1, 1]} : vector<16x32xf32> to vector<16x8xf32>
    %141 = vector.shape_cast %140 : vector<16x8xf32> to vector<2x8x8xf32>
    %142 = vector.extract_strided_slice %135 {offsets = [0, 0], sizes = [16, 8], strides = [1, 1]} : vector<16x32xf32> to vector<16x8xf32>
    %143 = vector.shape_cast %142 : vector<16x8xf32> to vector<2x8x8xf32>
    "tpu.trace_start"() <{level = 10 : i32, message = "bqd,bkd->bqk"}> : () -> ()
    %cst_57 = arith.constant dense<0.000000e+00> : vector<2x8x8xf32>
    %144 = tpu.matmul %139, %141, %cst_57 {dimension_numbers = #tpu.dot_dimension_numbers<[2], [2], [1], [1], [0, 0, 0, 1, 1, 1], [0], [0]>} : vector<2x8x8xf32>, vector<2x8x8xf32>, vector<2x8x8xf32> -> vector<2x8x8xf32>
    "tpu.trace_stop"() : () -> ()
    %145 = vector.broadcast %5 : vector<2x1x8xf32> to vector<2x8x8xf32>
    %146 = arith.addf %144, %145 : vector<2x8x8xf32>
    %cst_58 = arith.constant dense<0xFF800000> : vector<2x8xf32>
    %147 = vector.multi_reduction <maximumf>, %146, %cst_58 [2] : vector<2x8x8xf32> to vector<2x8xf32>
    %148 = vector.shape_cast %147 : vector<2x8xf32> to vector<2x8x1xf32>
    %149 = vector.broadcast %148 : vector<2x8x1xf32> to vector<2x8x8xf32>
    %150 = arith.subf %146, %149 : vector<2x8x8xf32>
    %151 = math.exp %150 : vector<2x8x8xf32>
    %cst_59 = arith.constant dense<0.000000e+00> : vector<2x8xf32>
    %152 = vector.multi_reduction <add>, %151, %cst_59 [2] : vector<2x8x8xf32> to vector<2x8xf32>
    %153 = vector.shape_cast %152 : vector<2x8xf32> to vector<2x8x1xf32>
    %154 = tpu.reciprocal %153 {approx = true} : vector<2x8x1xf32> -> vector<2x8x1xf32>
    %155 = vector.broadcast %154 : vector<2x8x1xf32> to vector<2x8x8xf32>
    %156 = arith.mulf %151, %155 : vector<2x8x8xf32>
    "tpu.trace_start"() <{level = 10 : i32, message = "bqk,bkd->bqd"}> : () -> ()
    %cst_60 = arith.constant dense<0.000000e+00> : vector<2x8x8xf32>
    %157 = tpu.matmul %156, %143, %cst_60 {dimension_numbers = #tpu.dot_dimension_numbers<[2], [1], [1], [2], [0, 0, 0, 1, 1, 2], [0], [0]>} : vector<2x8x8xf32>, vector<2x8x8xf32>, vector<2x8x8xf32> -> vector<2x8x8xf32>
    "tpu.trace_stop"() : () -> ()
    %158 = vector.extract_strided_slice %137 {offsets = [0, 8], sizes = [16, 8], strides = [1, 1]} : vector<16x32xf32> to vector<16x8xf32>
    %159 = vector.shape_cast %158 : vector<16x8xf32> to vector<2x8x8xf32>
    %160 = vector.extract_strided_slice %134 {offsets = [0, 8], sizes = [16, 8], strides = [1, 1]} : vector<16x32xf32> to vector<16x8xf32>
    %161 = vector.shape_cast %160 : vector<16x8xf32> to vector<2x8x8xf32>
    %162 = vector.extract_strided_slice %135 {offsets = [0, 8], sizes = [16, 8], strides = [1, 1]} : vector<16x32xf32> to vector<16x8xf32>
    %163 = vector.shape_cast %162 : vector<16x8xf32> to vector<2x8x8xf32>
    "tpu.trace_start"() <{level = 10 : i32, message = "bqd,bkd->bqk"}> : () -> ()
    %cst_61 = arith.constant dense<0.000000e+00> : vector<2x8x8xf32>
    %164 = tpu.matmul %159, %161, %cst_61 {dimension_numbers = #tpu.dot_dimension_numbers<[2], [2], [1], [1], [0, 0, 0, 1, 1, 1], [0], [0]>} : vector<2x8x8xf32>, vector<2x8x8xf32>, vector<2x8x8xf32> -> vector<2x8x8xf32>
    "tpu.trace_stop"() : () -> ()
    %165 = vector.broadcast %5 : vector<2x1x8xf32> to vector<2x8x8xf32>
    %166 = arith.addf %164, %165 : vector<2x8x8xf32>
    %cst_62 = arith.constant dense<0xFF800000> : vector<2x8xf32>
    %167 = vector.multi_reduction <maximumf>, %166, %cst_62 [2] : vector<2x8x8xf32> to vector<2x8xf32>
    %168 = vector.shape_cast %167 : vector<2x8xf32> to vector<2x8x1xf32>
    %169 = vector.broadcast %168 : vector<2x8x1xf32> to vector<2x8x8xf32>
    %170 = arith.subf %166, %169 : vector<2x8x8xf32>
    %171 = math.exp %170 : vector<2x8x8xf32>
    %cst_63 = arith.constant dense<0.000000e+00> : vector<2x8xf32>
    %172 = vector.multi_reduction <add>, %171, %cst_63 [2] : vector<2x8x8xf32> to vector<2x8xf32>
    %173 = vector.shape_cast %172 : vector<2x8xf32> to vector<2x8x1xf32>
    %174 = tpu.reciprocal %173 {approx = true} : vector<2x8x1xf32> -> vector<2x8x1xf32>
    %175 = vector.broadcast %174 : vector<2x8x1xf32> to vector<2x8x8xf32>
    %176 = arith.mulf %171, %175 : vector<2x8x8xf32>
    "tpu.trace_start"() <{level = 10 : i32, message = "bqk,bkd->bqd"}> : () -> ()
    %cst_64 = arith.constant dense<0.000000e+00> : vector<2x8x8xf32>
    %177 = tpu.matmul %176, %163, %cst_64 {dimension_numbers = #tpu.dot_dimension_numbers<[2], [1], [1], [2], [0, 0, 0, 1, 1, 2], [0], [0]>} : vector<2x8x8xf32>, vector<2x8x8xf32>, vector<2x8x8xf32> -> vector<2x8x8xf32>
    "tpu.trace_stop"() : () -> ()
    %178 = vector.extract_strided_slice %137 {offsets = [0, 16], sizes = [16, 8], strides = [1, 1]} : vector<16x32xf32> to vector<16x8xf32>
    %179 = vector.shape_cast %178 : vector<16x8xf32> to vector<2x8x8xf32>
    %180 = vector.extract_strided_slice %134 {offsets = [0, 16], sizes = [16, 8], strides = [1, 1]} : vector<16x32xf32> to vector<16x8xf32>
    %181 = vector.shape_cast %180 : vector<16x8xf32> to vector<2x8x8xf32>
    %182 = vector.extract_strided_slice %135 {offsets = [0, 16], sizes = [16, 8], strides = [1, 1]} : vector<16x32xf32> to vector<16x8xf32>
    %183 = vector.shape_cast %182 : vector<16x8xf32> to vector<2x8x8xf32>
    "tpu.trace_start"() <{level = 10 : i32, message = "bqd,bkd->bqk"}> : () -> ()
    %cst_65 = arith.constant dense<0.000000e+00> : vector<2x8x8xf32>
    %184 = tpu.matmul %179, %181, %cst_65 {dimension_numbers = #tpu.dot_dimension_numbers<[2], [2], [1], [1], [0, 0, 0, 1, 1, 1], [0], [0]>} : vector<2x8x8xf32>, vector<2x8x8xf32>, vector<2x8x8xf32> -> vector<2x8x8xf32>
    "tpu.trace_stop"() : () -> ()
    %185 = vector.broadcast %5 : vector<2x1x8xf32> to vector<2x8x8xf32>
    %186 = arith.addf %184, %185 : vector<2x8x8xf32>
    %cst_66 = arith.constant dense<0xFF800000> : vector<2x8xf32>
    %187 = vector.multi_reduction <maximumf>, %186, %cst_66 [2] : vector<2x8x8xf32> to vector<2x8xf32>
    %188 = vector.shape_cast %187 : vector<2x8xf32> to vector<2x8x1xf32>
    %189 = vector.broadcast %188 : vector<2x8x1xf32> to vector<2x8x8xf32>
    %190 = arith.subf %186, %189 : vector<2x8x8xf32>
    %191 = math.exp %190 : vector<2x8x8xf32>
    %cst_67 = arith.constant dense<0.000000e+00> : vector<2x8xf32>
    %192 = vector.multi_reduction <add>, %191, %cst_67 [2] : vector<2x8x8xf32> to vector<2x8xf32>
    %193 = vector.shape_cast %192 : vector<2x8xf32> to vector<2x8x1xf32>
    %194 = tpu.reciprocal %193 {approx = true} : vector<2x8x1xf32> -> vector<2x8x1xf32>
    %195 = vector.broadcast %194 : vector<2x8x1xf32> to vector<2x8x8xf32>
    %196 = arith.mulf %191, %195 : vector<2x8x8xf32>
    "tpu.trace_start"() <{level = 10 : i32, message = "bqk,bkd->bqd"}> : () -> ()
    %cst_68 = arith.constant dense<0.000000e+00> : vector<2x8x8xf32>
    %197 = tpu.matmul %196, %183, %cst_68 {dimension_numbers = #tpu.dot_dimension_numbers<[2], [1], [1], [2], [0, 0, 0, 1, 1, 2], [0], [0]>} : vector<2x8x8xf32>, vector<2x8x8xf32>, vector<2x8x8xf32> -> vector<2x8x8xf32>
    "tpu.trace_stop"() : () -> ()
    %198 = vector.extract_strided_slice %137 {offsets = [0, 24], sizes = [16, 8], strides = [1, 1]} : vector<16x32xf32> to vector<16x8xf32>
    %199 = vector.shape_cast %198 : vector<16x8xf32> to vector<2x8x8xf32>
    %200 = vector.extract_strided_slice %134 {offsets = [0, 24], sizes = [16, 8], strides = [1, 1]} : vector<16x32xf32> to vector<16x8xf32>
    %201 = vector.shape_cast %200 : vector<16x8xf32> to vector<2x8x8xf32>
    %202 = vector.extract_strided_slice %135 {offsets = [0, 24], sizes = [16, 8], strides = [1, 1]} : vector<16x32xf32> to vector<16x8xf32>
    %203 = vector.shape_cast %202 : vector<16x8xf32> to vector<2x8x8xf32>
    "tpu.trace_start"() <{level = 10 : i32, message = "bqd,bkd->bqk"}> : () -> ()
    %cst_69 = arith.constant dense<0.000000e+00> : vector<2x8x8xf32>
    %204 = tpu.matmul %199, %201, %cst_69 {dimension_numbers = #tpu.dot_dimension_numbers<[2], [2], [1], [1], [0, 0, 0, 1, 1, 1], [0], [0]>} : vector<2x8x8xf32>, vector<2x8x8xf32>, vector<2x8x8xf32> -> vector<2x8x8xf32>
    "tpu.trace_stop"() : () -> ()
    %205 = vector.broadcast %5 : vector<2x1x8xf32> to vector<2x8x8xf32>
    %206 = arith.addf %204, %205 : vector<2x8x8xf32>
    %cst_70 = arith.constant dense<0xFF800000> : vector<2x8xf32>
    %207 = vector.multi_reduction <maximumf>, %206, %cst_70 [2] : vector<2x8x8xf32> to vector<2x8xf32>
    %208 = vector.shape_cast %207 : vector<2x8xf32> to vector<2x8x1xf32>
    %209 = vector.broadcast %208 : vector<2x8x1xf32> to vector<2x8x8xf32>
    %210 = arith.subf %206, %209 : vector<2x8x8xf32>
    %211 = math.exp %210 : vector<2x8x8xf32>
    %cst_71 = arith.constant dense<0.000000e+00> : vector<2x8xf32>
    %212 = vector.multi_reduction <add>, %211, %cst_71 [2] : vector<2x8x8xf32> to vector<2x8xf32>
    %213 = vector.shape_cast %212 : vector<2x8xf32> to vector<2x8x1xf32>
    %214 = tpu.reciprocal %213 {approx = true} : vector<2x8x1xf32> -> vector<2x8x1xf32>
    %215 = vector.broadcast %214 : vector<2x8x1xf32> to vector<2x8x8xf32>
    %216 = arith.mulf %211, %215 : vector<2x8x8xf32>
    "tpu.trace_start"() <{level = 10 : i32, message = "bqk,bkd->bqd"}> : () -> ()
    %cst_72 = arith.constant dense<0.000000e+00> : vector<2x8x8xf32>
    %217 = tpu.matmul %216, %203, %cst_72 {dimension_numbers = #tpu.dot_dimension_numbers<[2], [1], [1], [2], [0, 0, 0, 1, 1, 2], [0], [0]>} : vector<2x8x8xf32>, vector<2x8x8xf32>, vector<2x8x8xf32> -> vector<2x8x8xf32>
    "tpu.trace_stop"() : () -> ()
    %218 = tpu.concatenate %157, %177, %197, %217 in 2 : vector<2x8x8xf32>, vector<2x8x8xf32>, vector<2x8x8xf32>, vector<2x8x8xf32> -> vector<2x8x32xf32>
    %219 = vector.shape_cast %218 : vector<2x8x32xf32> to vector<16x32xf32>
    %c0_73 = arith.constant 0 : index
    %c0_74 = arith.constant 0 : index
    %220 = vector.load %arg15[%c0_73, %c0_74] : memref<32x32xf32, #tpu.memory_space<vmem>>, vector<32x32xf32>
    %cst_75 = arith.constant dense<0.000000e+00> : vector<16x32xf32>
    %221 = tpu.matmul %219, %220, %cst_75 {dimension_numbers = #tpu.dot_dimension_numbers<[1], [0], [0], [1], [0, 0, 1, 1], [], []>} : vector<16x32xf32>, vector<32x32xf32>, vector<16x32xf32> -> vector<16x32xf32>
    %c0_76 = arith.constant 0 : index
    %c0_77 = arith.constant 0 : index
    %222 = vector.load %arg16[%c0_76, %c0_77] : memref<1x32xf32, #tpu.memory_space<vmem>>, vector<1x32xf32>
    %223 = vector.broadcast %222 : vector<1x32xf32> to vector<16x32xf32>
    %224 = arith.addf %221, %223 : vector<16x32xf32>
    %225 = arith.addf %123, %224 : vector<16x32xf32>
    %cst_78 = arith.constant dense<0.000000e+00> : vector<16xf32>
    %226 = vector.multi_reduction <add>, %225, %cst_78 [1] : vector<16x32xf32> to vector<16xf32>
    %227 = vector.shape_cast %226 : vector<16xf32> to vector<16x1xf32>
    %228 = arith.mulf %225, %225 : vector<16x32xf32>
    %cst_79 = arith.constant dense<0.000000e+00> : vector<16xf32>
    %229 = vector.multi_reduction <add>, %228, %cst_79 [1] : vector<16x32xf32> to vector<16xf32>
    %230 = vector.shape_cast %229 : vector<16xf32> to vector<16x1xf32>
    %cst_80 = arith.constant 3.125000e-02 : f32
    %231 = vector.broadcast %cst_80 : f32 to vector<16x1xf32>
    %232 = arith.mulf %227, %231 : vector<16x1xf32>
    %cst_81 = arith.constant 3.125000e-02 : f32
    %233 = vector.broadcast %cst_81 : f32 to vector<16x1xf32>
    %234 = arith.mulf %230, %233 : vector<16x1xf32>
    %235 = arith.mulf %232, %232 : vector<16x1xf32>
    %236 = arith.subf %234, %235 : vector<16x1xf32>
    %237 = vector.broadcast %232 : vector<16x1xf32> to vector<16x32xf32>
    %238 = arith.subf %225, %237 : vector<16x32xf32>
    %cst_82 = arith.constant 9.99999974E-6 : f32
    %239 = vector.broadcast %cst_82 : f32 to vector<16x1xf32>
    %240 = arith.addf %236, %239 : vector<16x1xf32>
    %241 = math.rsqrt %240 : vector<16x1xf32>
    %242 = vector.broadcast %241 : vector<16x1xf32> to vector<16x32xf32>
    %243 = arith.mulf %238, %242 : vector<16x32xf32>
    %c0_83 = arith.constant 0 : index
    %c0_84 = arith.constant 0 : index
    %244 = vector.load %arg17[%c0_83, %c0_84] : memref<1x32xf32, #tpu.memory_space<vmem>>, vector<1x32xf32>
    %245 = vector.broadcast %244 : vector<1x32xf32> to vector<16x32xf32>
    %246 = arith.mulf %243, %245 : vector<16x32xf32>
    %c0_85 = arith.constant 0 : index
    %c0_86 = arith.constant 0 : index
    %247 = vector.load %arg18[%c0_85, %c0_86] : memref<1x32xf32, #tpu.memory_space<vmem>>, vector<1x32xf32>
    %248 = vector.broadcast %247 : vector<1x32xf32> to vector<16x32xf32>
    %249 = arith.addf %246, %248 : vector<16x32xf32>
    %c0_87 = arith.constant 0 : index
    %c0_88 = arith.constant 0 : index
    %250 = vector.load %arg19[%c0_87, %c0_88] : memref<32x64xf32, #tpu.memory_space<vmem>>, vector<32x64xf32>
    %cst_89 = arith.constant dense<0.000000e+00> : vector<16x64xf32>
    %251 = tpu.matmul %249, %250, %cst_89 {dimension_numbers = #tpu.dot_dimension_numbers<[1], [0], [0], [1], [0, 0, 1, 1], [], []>} : vector<16x32xf32>, vector<32x64xf32>, vector<16x64xf32> -> vector<16x64xf32>
    %c0_90 = arith.constant 0 : index
    %c0_91 = arith.constant 0 : index
    %252 = vector.load %arg20[%c0_90, %c0_91] : memref<1x64xf32, #tpu.memory_space<vmem>>, vector<1x64xf32>
    %253 = vector.broadcast %252 : vector<1x64xf32> to vector<16x64xf32>
    %254 = arith.addf %251, %253 : vector<16x64xf32>
    %cst_92 = arith.constant 0.000000e+00 : f32
    %255 = vector.broadcast %cst_92 : f32 to vector<16x64xf32>
    %256 = arith.maximumf %254, %255 : vector<16x64xf32>
    %c0_93 = arith.constant 0 : index
    %c0_94 = arith.constant 0 : index
    %257 = vector.load %arg21[%c0_93, %c0_94] : memref<64x32xf32, #tpu.memory_space<vmem>>, vector<64x32xf32>
    %cst_95 = arith.constant dense<0.000000e+00> : vector<16x32xf32>
    %258 = tpu.matmul %256, %257, %cst_95 {dimension_numbers = #tpu.dot_dimension_numbers<[1], [0], [0], [1], [0, 0, 1, 1], [], []>} : vector<16x64xf32>, vector<64x32xf32>, vector<16x32xf32> -> vector<16x32xf32>
    %c0_96 = arith.constant 0 : index
    %c0_97 = arith.constant 0 : index
    %259 = vector.load %arg22[%c0_96, %c0_97] : memref<1x32xf32, #tpu.memory_space<vmem>>, vector<1x32xf32>
    %260 = vector.broadcast %259 : vector<1x32xf32> to vector<16x32xf32>
    %261 = arith.addf %258, %260 : vector<16x32xf32>
    %262 = arith.addf %249, %261 : vector<16x32xf32>
    %cst_98 = arith.constant dense<0.000000e+00> : vector<16xf32>
    %263 = vector.multi_reduction <add>, %262, %cst_98 [1] : vector<16x32xf32> to vector<16xf32>
    %264 = vector.shape_cast %263 : vector<16xf32> to vector<16x1xf32>
    %265 = arith.mulf %262, %262 : vector<16x32xf32>
    %cst_99 = arith.constant dense<0.000000e+00> : vector<16xf32>
    %266 = vector.multi_reduction <add>, %265, %cst_99 [1] : vector<16x32xf32> to vector<16xf32>
    %267 = vector.shape_cast %266 : vector<16xf32> to vector<16x1xf32>
    %cst_100 = arith.constant 3.125000e-02 : f32
    %268 = vector.broadcast %cst_100 : f32 to vector<16x1xf32>
    %269 = arith.mulf %264, %268 : vector<16x1xf32>
    %cst_101 = arith.constant 3.125000e-02 : f32
    %270 = vector.broadcast %cst_101 : f32 to vector<16x1xf32>
    %271 = arith.mulf %267, %270 : vector<16x1xf32>
    %272 = arith.mulf %269, %269 : vector<16x1xf32>
    %273 = arith.subf %271, %272 : vector<16x1xf32>
    %274 = vector.broadcast %269 : vector<16x1xf32> to vector<16x32xf32>
    %275 = arith.subf %262, %274 : vector<16x32xf32>
    %cst_102 = arith.constant 9.99999974E-6 : f32
    %276 = vector.broadcast %cst_102 : f32 to vector<16x1xf32>
    %277 = arith.addf %273, %276 : vector<16x1xf32>
    %278 = math.rsqrt %277 : vector<16x1xf32>
    %279 = vector.broadcast %278 : vector<16x1xf32> to vector<16x32xf32>
    %280 = arith.mulf %275, %279 : vector<16x32xf32>
    %c0_103 = arith.constant 0 : index
    %c0_104 = arith.constant 0 : index
    %281 = vector.load %arg23[%c0_103, %c0_104] : memref<1x32xf32, #tpu.memory_space<vmem>>, vector<1x32xf32>
    %282 = vector.broadcast %281 : vector<1x32xf32> to vector<16x32xf32>
    %283 = arith.mulf %280, %282 : vector<16x32xf32>
    %c0_105 = arith.constant 0 : index
    %c0_106 = arith.constant 0 : index
    %284 = vector.load %arg24[%c0_105, %c0_106] : memref<1x32xf32, #tpu.memory_space<vmem>>, vector<1x32xf32>
    %285 = vector.broadcast %284 : vector<1x32xf32> to vector<16x32xf32>
    %286 = arith.addf %283, %285 : vector<16x32xf32>
    %287 = vector.shape_cast %286 : vector<16x32xf32> to vector<2x8x32xf32>
    %c0_107 = arith.constant 0 : index
    %c0_108 = arith.constant 0 : index
    %c0_109 = arith.constant 0 : index
    %288 = vector.load %arg25[%c0_107, %c0_108, %c0_109] : memref<2x8x32xf32, #tpu.memory_space<vmem>>, vector<2x8x32xf32>
    tpu.vector_store %arg25[%c0_107, %c0_108, %c0_109], %287 {strides = array<i32>} : memref<2x8x32xf32, #tpu.memory_space<vmem>>, vector<2x8x32xf32>,
    return
  }
  func.func @transform_0(%arg0: i32) -> (i32, i32, i32) {
    %c0_i32 = arith.constant 0 : i32
    %c0_i32_0 = arith.constant 0 : i32
    %c0_i32_1 = arith.constant 0 : i32
    return %arg0, %c0_i32, %c0_i32_0 : i32, i32, i32
  }
  func.func @transform_1(%arg0: i32) -> (i32, i32, i32) {
    %c0_i32 = arith.constant 0 : i32
    %c0_i32_0 = arith.constant 0 : i32
    %c0_i32_1 = arith.constant 0 : i32
    return %arg0, %c0_i32, %c0_i32_0 : i32, i32, i32
  }
  func.func @transform_2(%arg0: i32) -> (i32, i32, i32) {
    %c0_i32 = arith.constant 0 : i32
    %c0_i32_0 = arith.constant 0 : i32
    %c0_i32_1 = arith.constant 0 : i32
    return %arg0, %c0_i32, %c0_i32_0 : i32, i32, i32
  }
  func.func @transform_3(%arg0: i32) -> (i32, i32, i32) {
    %c0_i32 = arith.constant 0 : i32
    %c0_i32_0 = arith.constant 0 : i32
    %c0_i32_1 = arith.constant 0 : i32
    return %arg0, %c0_i32, %c0_i32_0 : i32, i32, i32
  }
  func.func @transform_4(%arg0: i32) -> (i32, i32) {
    %c0_i32 = arith.constant 0 : i32
    %c0_i32_0 = arith.constant 0 : i32
    %c0_i32_1 = arith.constant 0 : i32
    return %c0_i32, %c0_i32_0 : i32, i32
  }
  func.func @transform_5(%arg0: i32) -> (i32, i32) {
    %c0_i32 = arith.constant 0 : i32
    %c0_i32_0 = arith.constant 0 : i32
    %c0_i32_1 = arith.constant 0 : i32
    return %c0_i32, %c0_i32_0 : i32, i32
  }
  func.func @transform_6(%arg0: i32) -> (i32, i32) {
    %c0_i32 = arith.constant 0 : i32
    %c0_i32_0 = arith.constant 0 : i32
    %c0_i32_1 = arith.constant 0 : i32
    return %c0_i32, %c0_i32_0 : i32, i32
  }
  func.func @transform_7(%arg0: i32) -> (i32, i32) {
    %c0_i32 = arith.constant 0 : i32
    %c0_i32_0 = arith.constant 0 : i32
    %c0_i32_1 = arith.constant 0 : i32
    return %c0_i32, %c0_i32_0 : i32, i32
  }
  func.func @transform_8(%arg0: i32) -> (i32, i32) {
    %c0_i32 = arith.constant 0 : i32
    %c0_i32_0 = arith.constant 0 : i32
    %c0_i32_1 = arith.constant 0 : i32
    return %c0_i32, %c0_i32_0 : i32, i32
  }
  func.func @transform_9(%arg0: i32) -> (i32, i32) {
    %c0_i32 = arith.constant 0 : i32
    %c0_i32_0 = arith.constant 0 : i32
    %c0_i32_1 = arith.constant 0 : i32
    return %c0_i32, %c0_i32_0 : i32, i32
  }
  func.func @transform_10(%arg0: i32) -> (i32, i32) {
    %c0_i32 = arith.constant 0 : i32
    %c0_i32_0 = arith.constant 0 : i32
    %c0_i32_1 = arith.constant 0 : i32
    return %c0_i32, %c0_i32_0 : i32, i32
  }
  func.func @transform_11(%arg0: i32) -> (i32, i32) {
    %c0_i32 = arith.constant 0 : i32
    %c0_i32_0 = arith.constant 0 : i32
    %c0_i32_1 = arith.constant 0 : i32
    return %c0_i32, %c0_i32_0 : i32, i32
  }
  func.func @transform_12(%arg0: i32) -> (i32, i32) {
    %c0_i32 = arith.constant 0 : i32
    %c0_i32_0 = arith.constant 0 : i32
    %c0_i32_1 = arith.constant 0 : i32
    return %c0_i32, %c0_i32_0 : i32, i32
  }
  func.func @transform_13(%arg0: i32) -> (i32, i32) {
    %c0_i32 = arith.constant 0 : i32
    %c0_i32_0 = arith.constant 0 : i32
    %c0_i32_1 = arith.constant 0 : i32
    return %c0_i32, %c0_i32_0 : i32, i32
  }
  func.func @transform_14(%arg0: i32) -> (i32, i32) {
    %c0_i32 = arith.constant 0 : i32
    %c0_i32_0 = arith.constant 0 : i32
    %c0_i32_1 = arith.constant 0 : i32
    return %c0_i32, %c0_i32_0 : i32, i32
  }
  func.func @transform_15(%arg0: i32) -> (i32, i32) {
    %c0_i32 = arith.constant 0 : i32
    %c0_i32_0 = arith.constant 0 : i32
    %c0_i32_1 = arith.constant 0 : i32
    return %c0_i32, %c0_i32_0 : i32, i32
  }
  func.func @transform_16(%arg0: i32) -> (i32, i32) {
    %c0_i32 = arith.constant 0 : i32
    %c0_i32_0 = arith.constant 0 : i32
    %c0_i32_1 = arith.constant 0 : i32
    return %c0_i32, %c0_i32_0 : i32, i32
  }
  func.func @transform_17(%arg0: i32) -> (i32, i32) {
    %c0_i32 = arith.constant 0 : i32
    %c0_i32_0 = arith.constant 0 : i32
    %c0_i32_1 = arith.constant 0 : i32
    return %c0_i32, %c0_i32_0 : i32, i32
  }
  func.func @transform_18(%arg0: i32) -> (i32, i32) {
    %c0_i32 = arith.constant 0 : i32
    %c0_i32_0 = arith.constant 0 : i32
    %c0_i32_1 = arith.constant 0 : i32
    return %c0_i32, %c0_i32_0 : i32, i32
  }
  func.func @transform_19(%arg0: i32) -> (i32, i32) {
    %c0_i32 = arith.constant 0 : i32
    %c0_i32_0 = arith.constant 0 : i32
    %c0_i32_1 = arith.constant 0 : i32
    return %c0_i32, %c0_i32_0 : i32, i32
  }
  func.func @transform_20(%arg0: i32) -> (i32, i32) {
    %c0_i32 = arith.constant 0 : i32
    %c0_i32_0 = arith.constant 0 : i32
    %c0_i32_1 = arith.constant 0 : i32
    return %c0_i32, %c0_i32_0 : i32, i32
  }
  func.func @transform_21(%arg0: i32) -> (i32, i32) {
    %c0_i32 = arith.constant 0 : i32
    %c0_i32_0 = arith.constant 0 : i32
    %c0_i32_1 = arith.constant 0 : i32
    return %c0_i32, %c0_i32_0 : i32, i32
  }
  func.func @transform_22(%arg0: i32) -> (i32, i32) {
    %c0_i32 = arith.constant 0 : i32
    %c0_i32_0 = arith.constant 0 : i32
    %c0_i32_1 = arith.constant 0 : i32
    return %c0_i32, %c0_i32_0 : i32, i32
  }
  func.func @transform_23(%arg0: i32) -> (i32, i32) {
    %c0_i32 = arith.constant 0 : i32
    %c0_i32_0 = arith.constant 0 : i32
    %c0_i32_1 = arith.constant 0 : i32
    return %c0_i32, %c0_i32_0 : i32, i32
  }
  func.func @transform_24(%arg0: i32) -> (i32, i32, i32) {
    %c0_i32 = arith.constant 0 : i32
    %c0_i32_0 = arith.constant 0 : i32
    %c0_i32_1 = arith.constant 0 : i32
    return %arg0, %c0_i32, %c0_i32_0 : i32, i32, i32
  }
}

</mosaic_0001>

<llo_original>
// kernel: tpu_custom_call.1
$region0: #{tpu_custom_call.1}
  #allocation0 [shape = 'u32[]', space=smem, size = 0x4, offset = 0x4, fixed_abs, tag = 'smem constant byte address 0x4 - core index']
  #allocation1 [shape = 'u32[72,128]{1,0:T(1,128)}', space=vmem, size = 0x9000, scoped, tag = 'internal scratch']
  %s0 = inlined_call_operand.hbm [shape: f32[2,8,32], index: 0, kind: input, shape index: {}]
  %s1 = inlined_call_operand.hbm [shape: f32[2,8,32], index: 1, kind: input, shape index: {}]
  %s2 = inlined_call_operand.hbm [shape: f32[2,8,8], index: 2, kind: input, shape index: {}]
  %s3 = inlined_call_operand.hbm [shape: f32[2,1,8], index: 3, kind: input, shape index: {}]
  %s4 = inlined_call_operand.vmem [shape: f32[32,96], index: 4, kind: input, shape index: {}]
  %s5 = inlined_call_operand.vmem [shape: f32[1,96], index: 5, kind: input, shape index: {}]
  %s6 = inlined_call_operand.vmem [shape: f32[32,32], index: 6, kind: input, shape index: {}]
  %s7 = inlined_call_operand.vmem [shape: f32[1,32], index: 7, kind: input, shape index: {}]
  %s8 = inlined_call_operand.vmem [shape: f32[1,32], index: 8, kind: input, shape index: {}]
  %s9 = inlined_call_operand.vmem [shape: f32[1,32], index: 9, kind: input, shape index: {}]
  %s10 = inlined_call_operand.vmem [shape: f32[32,32], index: 10, kind: input, shape index: {}]
  %s11 = inlined_call_operand.vmem [shape: f32[1,32], index: 11, kind: input, shape index: {}]
  %s12 = inlined_call_operand.hbm [shape: f32[32,64], index: 12, kind: input, shape index: {}]
  %s13 = inlined_call_operand.vmem [shape: f32[1,64], index: 13, kind: input, shape index: {}]
  %s14 = inlined_call_operand.hbm [shape: f32[32,32], index: 14, kind: input, shape index: {}]
  %s15 = inlined_call_operand.vmem [shape: f32[1,32], index: 15, kind: input, shape index: {}]
  %s16 = inlined_call_operand.vmem [shape: f32[1,32], index: 16, kind: input, shape index: {}]
  %s17 = inlined_call_operand.vmem [shape: f32[1,32], index: 17, kind: input, shape index: {}]
  %s18 = inlined_call_operand.hbm [shape: f32[32,64], index: 18, kind: input, shape index: {}]
  %s19 = inlined_call_operand.vmem [shape: f32[1,64], index: 19, kind: input, shape index: {}]
  %s20 = inlined_call_operand.vmem [shape: f32[64,32], index: 20, kind: input, shape index: {}]
  %s21 = inlined_call_operand.vmem [shape: f32[1,32], index: 21, kind: input, shape index: {}]
  %s22 = inlined_call_operand.vmem [shape: f32[1,32], index: 22, kind: input, shape index: {}]
  %s23 = inlined_call_operand.vmem [shape: f32[1,32], index: 23, kind: input, shape index: {}]
  %s24 = inlined_call_operand.hbm [shape: f32[2,8,32], index: 24, kind: output, shape index: {}]
  %s25 = sld [smem:[#allocation0]]
  $region134: #{tpu_custom_call.1} parent=0
    _
  %s27 = ssub.s32 1, %s25
  %s28 = scalar_select 0, %s27, %s25
  $region1: #{tpu_custom_call.1} parent=0
    #allocation2 [shape = 'u8[8192]{0}', space=vmem, size = 0x2000, scoped, tag = 'input window, operand 0, single buffered']
    #allocation3 [shape = 's32[1]{0}', space=sflag, size = 0x4, scoped, tag = 'scoped memory for tpu_custom_call.1']
    #allocation4 [shape = 's32[1]{0}', space=sflag, size = 0x4, scoped, tag = 'scoped memory for tpu_custom_call.1']
    #allocation5 [shape = 'u8[8192]{0}', space=vmem, size = 0x2000, scoped, tag = 'input window, operand 1, single buffered']
    #allocation6 [shape = 's32[1]{0}', space=sflag, size = 0x4, scoped, tag = 'scoped memory for tpu_custom_call.1']
    #allocation7 [shape = 'u8[8192]{0}', space=vmem, size = 0x2000, scoped, tag = 'input window, operand 2, single buffered']
    #allocation8 [shape = 'u8[1024]{0}', space=vmem, size = 0x400, scoped, tag = 'input window, operand 3, single buffered']
    #allocation9 [shape = 's32[1]{0}', space=sflag, size = 0x4, scoped, tag = 'scoped memory for tpu_custom_call.1']
    #allocation10 [shape = 'u8[16384]{0}', space=vmem, size = 0x4000, scoped, tag = 'input window, operand 12, single buffered']
    #allocation11 [shape = 'u8[16384]{0}', space=vmem, size = 0x4000, scoped, tag = 'input window, operand 14, single buffered']
    #allocation12 [shape = 's32[1]{0}', space=sflag, size = 0x4, scoped, tag = 'scoped memory for tpu_custom_call.1']
    #allocation13 [shape = 'u8[16384]{0}', space=vmem, size = 0x4000, scoped, tag = 'input window, operand 18, single buffered']
    #allocation14 [shape = 'u8[8192]{0}', space=vmem, size = 0x2000, scoped, tag = 'output window, operand 0, single buffered']
    %29 = vsyncpa [#allocation3], 0
    %30 = vsyncpa [#allocation6], 0
    %31 = vsyncpa [#allocation9], 0
    %32 = vsyncpa [#allocation12], 0
    %33 = vsyncpa [#allocation4], 0
    // Predicated region
    $region2: #{tpu_custom_call.1} parent=1 // pred_check
      _
    $region3: #{tpu_custom_call.1} parent=1 // pred_check_branch
      %35 = sbr.rel (0) target = $region5
    $region4: #{tpu_custom_call.1} parent=1 // pred_region
      %37 = vsyncadd [#allocation3], 0
      %s38 = sshll.u32 %s0, 4
      %s39 = int_to_ptr.hbm [resolvable:$true] %s38
      %s40 = sshll.u32 [#allocation2], 4
      %s41 = int_to_ptr.vmem [resolvable:$true] %s40
      %46 = dma.hbm_to_vmem [thread:$0]  %s39, 256, %s41, [#allocation3], 128, 128, 8
    $region5: #{tpu_custom_call.1} parent=1 // pred_fallthru
      _
    // Predicated region
    $region6: #{tpu_custom_call.1} parent=1 // pred_check
      _
    $region7: #{tpu_custom_call.1} parent=1 // pred_check_branch
      %48 = sbr.rel (0) target = $region9
    $region8: #{tpu_custom_call.1} parent=1 // pred_region
      %50 = vsyncadd [#allocation6], 0
      %s51 = sshll.u32 %s1, 4
      %s52 = int_to_ptr.hbm [resolvable:$true] %s51
      %s53 = sshll.u32 [#allocation5], 4
      %s54 = int_to_ptr.vmem [resolvable:$true] %s53
      %59 = dma.hbm_to_vmem [thread:$0]  %s52, 256, %s54, [#allocation6], 128, 128, 8
    $region9: #{tpu_custom_call.1} parent=1 // pred_fallthru
      _
    // Predicated region
    $region10: #{tpu_custom_call.1} parent=1 // pred_check
      _
    $region11: #{tpu_custom_call.1} parent=1 // pred_check_branch
      %61 = sbr.rel (0) target = $region13
    $region12: #{tpu_custom_call.1} parent=1 // pred_region
      %63 = vsyncadd [#allocation6], 0
      %s64 = sshll.u32 %s2, 4
      %s65 = int_to_ptr.hbm [resolvable:$true] %s64
      %s66 = sshll.u32 [#allocation7], 4
      %s67 = int_to_ptr.vmem [resolvable:$true] %s66
      %72 = dma.hbm_to_vmem [thread:$0]  %s65, 256, %s67, [#allocation6], 128, 128, 8
    $region13: #{tpu_custom_call.1} parent=1 // pred_fallthru
      _
    // Predicated region
    $region14: #{tpu_custom_call.1} parent=1 // pred_check
      _
    $region15: #{tpu_custom_call.1} parent=1 // pred_check_branch
      %74 = sbr.rel (0) target = $region17
    $region16: #{tpu_custom_call.1} parent=1 // pred_region
      %76 = vsyncadd [#allocation9], 0
      %s77 = sshll.u32 %s3, 4
      %s78 = int_to_ptr.hbm [resolvable:$true] %s77
      %s79 = sshll.u32 [#allocation8], 4
      %s80 = int_to_ptr.vmem [resolvable:$true] %s79
      %85 = dma.hbm_to_vmem [thread:$0]  %s78, 32, %s80, [#allocation9], 16, 16, 1
    $region17: #{tpu_custom_call.1} parent=1 // pred_fallthru
      _
    // Predicated region
    $region18: #{tpu_custom_call.1} parent=1 // pred_check
      _
    $region19: #{tpu_custom_call.1} parent=1 // pred_check_branch
      %87 = sbr.rel (0) target = $region21
    $region20: #{tpu_custom_call.1} parent=1 // pred_region
      _
    $region21: #{tpu_custom_call.1} parent=1 // pred_fallthru
      _
    // Predicated region
    $region22: #{tpu_custom_call.1} parent=1 // pred_check
      _
    $region23: #{tpu_custom_call.1} parent=1 // pred_check_branch
      %89 = sbr.rel (0) target = $region25
    $region24: #{tpu_custom_call.1} parent=1 // pred_region
      _
    $region25: #{tpu_custom_call.1} parent=1 // pred_fallthru
      _
    // Predicated region
    $region26: #{tpu_custom_call.1} parent=1 // pred_check
      _
    $region27: #{tpu_custom_call.1} parent=1 // pred_check_branch
      %91 = sbr.rel (0) target = $region29
    $region28: #{tpu_custom_call.1} parent=1 // pred_region
      _
    $region29: #{tpu_custom_call.1} parent=1 // pred_fallthru
      _
    // Predicated region
    $region30: #{tpu_custom_call.1} parent=1 // pred_check
      _
    $region31: #{tpu_custom_call.1} parent=1 // pred_check_branch
      %93 = sbr.rel (0) target = $region33
    $region32: #{tpu_custom_call.1} parent=1 // pred_region
      _
    $region33: #{tpu_custom_call.1} parent=1 // pred_fallthru
      _
    // Predicated region
    $region34: #{tpu_custom_call.1} parent=1 // pred_check
      _
    $region35: #{tpu_custom_call.1} parent=1 // pred_check_branch
      %95 = sbr.rel (0) target = $region37
    $region36: #{tpu_custom_call.1} parent=1 // pred_region
      _
    $region37: #{tpu_custom_call.1} parent=1 // pred_fallthru
      _
    // Predicated region
    $region38: #{tpu_custom_call.1} parent=1 // pred_check
      _
    $region39: #{tpu_custom_call.1} parent=1 // pred_check_branch
      %97 = sbr.rel (0) target = $region41
    $region40: #{tpu_custom_call.1} parent=1 // pred_region
      _
    $region41: #{tpu_custom_call.1} parent=1 // pred_fallthru
      _
    // Predicated region
    $region42: #{tpu_custom_call.1} parent=1 // pred_check
      _
    $region43: #{tpu_custom_call.1} parent=1 // pred_check_branch
      %99 = sbr.rel (0) target = $region45
    $region44: #{tpu_custom_call.1} parent=1 // pred_region
      _
    $region45: #{tpu_custom_call.1} parent=1 // pred_fallthru
      _
    // Predicated region
    $region46: #{tpu_custom_call.1} parent=1 // pred_check
      _
    $region47: #{tpu_custom_call.1} parent=1 // pred_check_branch
      %101 = sbr.rel (0) target = $region49
    $region48: #{tpu_custom_call.1} parent=1 // pred_region
      _
    $region49: #{tpu_custom_call.1} parent=1 // pred_fallthru
      _
    // Predicated region
    $region50: #{tpu_custom_call.1} parent=1 // pred_check
      _
    $region51: #{tpu_custom_call.1} parent=1 // pred_check_branch
      %103 = sbr.rel (0) target = $region53
    $region52: #{tpu_custom_call.1} parent=1 // pred_region
      %105 = vsyncadd [#allocation9], 0
      %s106 = sshll.u32 %s12, 4
      %s107 = int_to_ptr.hbm [resolvable:$true] %s106
      %s108 = sshll.u32 [#allocation10], 4
      %s109 = int_to_ptr.vmem [resolvable:$true] %s108
      %114 = dma.hbm_to_vmem [thread:$0]  %s107, 512, %s109, [#allocation9], 128, 128, 8
    $region53: #{tpu_custom_call.1} parent=1 // pred_fallthru
      _
    // Predicated region
    $region54: #{tpu_custom_call.1} parent=1 // pred_check
      _
    $region55: #{tpu_custom_call.1} parent=1 // pred_check_branch
      %116 = sbr.rel (0) target = $region57
    $region56: #{tpu_custom_call.1} parent=1 // pred_region
      _
    $region57: #{tpu_custom_call.1} parent=1 // pred_fallthru
      _
    // Predicated region
    $region58: #{tpu_custom_call.1} parent=1 // pred_check
      _
    $region59: #{tpu_custom_call.1} parent=1 // pred_check_branch
      %118 = sbr.rel (0) target = $region61
    $region60: #{tpu_custom_call.1} parent=1 // pred_region
      %120 = vsyncadd [#allocation12], 0
      %s121 = sshll.u32 %s14, 4
      %s122 = int_to_ptr.hbm [resolvable:$true] %s121
      %s123 = sshll.u32 [#allocation11], 4
      %s124 = int_to_ptr.vmem [resolvable:$true] %s123
      %129 = dma.hbm_to_vmem [thread:$0]  %s122, 512, %s124, [#allocation12], 128, 128, 8
    $region61: #{tpu_custom_call.1} parent=1 // pred_fallthru
      _
    // Predicated region
    $region62: #{tpu_custom_call.1} parent=1 // pred_check
      _
    $region63: #{tpu_custom_call.1} parent=1 // pred_check_branch
      %131 = sbr.rel (0) target = $region65
    $region64: #{tpu_custom_call.1} parent=1 // pred_region
      _
    $region65: #{tpu_custom_call.1} parent=1 // pred_fallthru
      _
    // Predicated region
    $region66: #{tpu_custom_call.1} parent=1 // pred_check
      _
    $region67: #{tpu_custom_call.1} parent=1 // pred_check_branch
      %133 = sbr.rel (0) target = $region69
    $region68: #{tpu_custom_call.1} parent=1 // pred_region
      _
    $region69: #{tpu_custom_call.1} parent=1 // pred_fallthru
      _
    // Predicated region
    $region70: #{tpu_custom_call.1} parent=1 // pred_check
      _
    $region71: #{tpu_custom_call.1} parent=1 // pred_check_branch
      %135 = sbr.rel (0) target = $region73
    $region72: #{tpu_custom_call.1} parent=1 // pred_region
      _
    $region73: #{tpu_custom_call.1} parent=1 // pred_fallthru
      _
    // Predicated region
    $region74: #{tpu_custom_call.1} parent=1 // pred_check
      _
    $region75: #{tpu_custom_call.1} parent=1 // pred_check_branch
      %137 = sbr.rel (0) target = $region77
    $region76: #{tpu_custom_call.1} parent=1 // pred_region
      %139 = vsyncadd [#allocation12], 0
      %s140 = sshll.u32 %s18, 4
      %s141 = int_to_ptr.hbm [resolvable:$true] %s140
      %s142 = sshll.u32 [#allocation13], 4
      %s143 = int_to_ptr.vmem [resolvable:$true] %s142
      %148 = dma.hbm_to_vmem [thread:$0]  %s141, 512, %s143, [#allocation12], 128, 128, 8
    $region77: #{tpu_custom_call.1} parent=1 // pred_fallthru
      _
    // Predicated region
    $region78: #{tpu_custom_call.1} parent=1 // pred_check
      _
    $region79: #{tpu_custom_call.1} parent=1 // pred_check_branch
      %150 = sbr.rel (0) target = $region81
    $region80: #{tpu_custom_call.1} parent=1 // pred_region
      _
    $region81: #{tpu_custom_call.1} parent=1 // pred_fallthru
      _
    // Predicated region
    $region82: #{tpu_custom_call.1} parent=1 // pred_check
      _
    $region83: #{tpu_custom_call.1} parent=1 // pred_check_branch
      %152 = sbr.rel (0) target = $region85
    $region84: #{tpu_custom_call.1} parent=1 // pred_region
      _
    $region85: #{tpu_custom_call.1} parent=1 // pred_fallthru
      _
    // Predicated region
    $region86: #{tpu_custom_call.1} parent=1 // pred_check
      _
    $region87: #{tpu_custom_call.1} parent=1 // pred_check_branch
      %154 = sbr.rel (0) target = $region89
    $region88: #{tpu_custom_call.1} parent=1 // pred_region
      _
    $region89: #{tpu_custom_call.1} parent=1 // pred_fallthru
      _
    // Predicated region
    $region90: #{tpu_custom_call.1} parent=1 // pred_check
      _
    $region91: #{tpu_custom_call.1} parent=1 // pred_check_branch
      %156 = sbr.rel (0) target = $region93
    $region92: #{tpu_custom_call.1} parent=1 // pred_region
      _
    $region93: #{tpu_custom_call.1} parent=1 // pred_fallthru
      _
    // Predicated region
    $region94: #{tpu_custom_call.1} parent=1 // pred_check
      _
    $region95: #{tpu_custom_call.1} parent=1 // pred_check_branch
      %158 = sbr.rel (0) target = $region97
    $region96: #{tpu_custom_call.1} parent=1 // pred_region
      _
    $region97: #{tpu_custom_call.1} parent=1 // pred_fallthru
      _
    // Predicated region
    $region98: #{tpu_custom_call.1} parent=1 // pred_check
      _
    $region99: #{tpu_custom_call.1} parent=1 // pred_check_branch
      %160 = sbr.rel (0) target = $region101
    $region100: #{tpu_custom_call.1} parent=1 // pred_region
      %162 = dma.done [#allocation3], 256
    $region101: #{tpu_custom_call.1} parent=1 // pred_fallthru
      _
    // Predicated region
    $region102: #{tpu_custom_call.1} parent=1 // pred_check
      _
    $region103: #{tpu_custom_call.1} parent=1 // pred_check_branch
      %164 = sbr.rel (0) target = $region105
    $region104: #{tpu_custom_call.1} parent=1 // pred_region
      %166 = dma.done [#allocation6], 256
    $region105: #{tpu_custom_call.1} parent=1 // pred_fallthru
      _
    // Predicated region
    $region106: #{tpu_custom_call.1} parent=1 // pred_check
      _
    $region107: #{tpu_custom_call.1} parent=1 // pred_check_branch
      %168 = sbr.rel (0) target = $region109
    $region108: #{tpu_custom_call.1} parent=1 // pred_region
      %170 = dma.done [#allocation6], 256
    $region109: #{tpu_custom_call.1} parent=1 // pred_fallthru
      _
    // Predicated region
    $region110: #{tpu_custom_call.1} parent=1 // pred_check
      _
    $region111: #{tpu_custom_call.1} parent=1 // pred_check_branch
      %172 = sbr.rel (0) target = $region113
    $region112: #{tpu_custom_call.1} parent=1 // pred_region
      %174 = dma.done [#allocation9], 32
    $region113: #{tpu_custom_call.1} parent=1 // pred_fallthru
      _
    // Predicated region
    $region114: #{tpu_custom_call.1} parent=1 // pred_check
      _
    $region115: #{tpu_custom_call.1} parent=1 // pred_check_branch
      %176 = sbr.rel (0) target = $region117
    $region116: #{tpu_custom_call.1} parent=1 // pred_region
      %178 = dma.done [#allocation9], 512
    $region117: #{tpu_custom_call.1} parent=1 // pred_fallthru
      _
    // Predicated region
    $region118: #{tpu_custom_call.1} parent=1 // pred_check
      _
    $region119: #{tpu_custom_call.1} parent=1 // pred_check_branch
      %180 = sbr.rel (0) target = $region121
    $region120: #{tpu_custom_call.1} parent=1 // pred_region
      %182 = dma.done [#allocation12], 512
    $region121: #{tpu_custom_call.1} parent=1 // pred_fallthru
      _
    // Predicated region
    $region122: #{tpu_custom_call.1} parent=1 // pred_check
      _
    $region123: #{tpu_custom_call.1} parent=1 // pred_check_branch
      %184 = sbr.rel (0) target = $region125
    $region124: #{tpu_custom_call.1} parent=1 // pred_region
      %186 = dma.done [#allocation12], 512
    $region125: #{tpu_custom_call.1} parent=1 // pred_fallthru
      _
    %v187 = vld [vmem:[#allocation2] sm:$0xff]
    %v188 = vld [vmem:[#allocation2 + $0x8] sm:$0xff]
    %v189 = vld [vmem:[#allocation5] sm:$0xff]
    %v190 = vld [vmem:[#allocation5 + $0x8] sm:$0xff]
    %v191 = vld [vmem:[#allocation7] sm:$0xff]
    %v192 = vld [vmem:[#allocation7 + $0x8] sm:$0xff]
    %v193 = vld [vmem:[#allocation8] sm:$0x1]
    %v194 = vld [vmem:[#allocation8 + $0x1] sm:$0x1]
    %v195 = vld [vmem:[%s4] sm:$0xff]
    %v196 = vld [vmem:[%s4 + $0x8] sm:$0xff]
    %v197 = vld [vmem:[%s4 + $0x10] sm:$0xff]
    %v198 = vld [vmem:[%s4 + $0x18] sm:$0xff]
    %v199 = vld [vmem:[%s5] sm:$0x1]
    %v201 = vperm.slane %v199, 0
    %vm203 = vcmask 261120
    %v205 = vsel %vm203, %v187, 0
    %v208 = vsel %vm203, %v188, 0
    %210 = vmatpush.msra.mxu0 0.0
    %211 = vmatpush.msra.mxu0 0.0
    %212 = vmatpush.msra.mxu0 0.0
    %213 = vmatpush.msra.mxu0 0.0
    %214 = vmatpush.msra.mxu0 0.0
    %215 = vmatpush.msra.mxu0 0.0
    %216 = vmatpush.msra.mxu0 0.0
    %217 = vmatpush.msra.mxu0 0.0
    %218 = vmatpush.msra.mxu0 0.0
    %219 = vmatpush.msra.mxu0 0.0
    %220 = vmatpush.msra.mxu0 0.0
    %221 = vmatpush.msra.mxu0 0.0
    %222 = vmatpush.msra.mxu0 %v198
    %223 = vmatpush.msra.mxu0 %v197
    %224 = vmatpush.msra.mxu0 %v196
    %225 = vmatpush.msra.mxu0 %v195
    %226 = vmatmul.f32.gmra.mxu0 %v205
    %v227 = vpop.f32.mrf.mxu0
    %v228 = vadd.f32 %v201, %v227
    %229 = vmatmul.f32.gmra.mxu0 %v208
    %v230 = vpop.f32.mrf.mxu0
    %v231 = vadd.f32 %v201, %v230
    %232 = vdwg.mxu0
    %v233 = vmul.f32 %v228, 0.35355338
    %v234 = vmul.f32 %v231, 0.35355338
    %236 = vrot.lane.b32.xlu0 %v228, 96
    %v237 = vpop.permute.xlu0 %236
    %vm238 = vcmask 64512
    %v240 = vsel %vm238, %v233, 0
    %v242 = vsel %vm238, %v237, 0
    %244 = vmatpush.xpose.msra.mxu0 0.0
    %245 = vmatpush.xpose.msra.mxu0 0.0
    %246 = vmatpush.xpose.msra.mxu0 0.0
    %247 = vmatpush.xpose.msra.mxu0 0.0
    %248 = vmatpush.xpose.msra.mxu0 0.0
    %249 = vmatpush.xpose.msra.mxu0 0.0
    %250 = vmatpush.xpose.msra.mxu0 0.0
    %251 = vmatpush.xpose.msra.mxu0 0.0
    %252 = vmatpush.xpose.msra.mxu0 0.0
    %253 = vmatpush.xpose.msra.mxu0 0.0
    %254 = vmatpush.xpose.msra.mxu0 0.0
    %255 = vmatpush.xpose.msra.mxu0 0.0
    %256 = vmatpush.xpose.msra.mxu0 0.0
    %257 = vmatpush.xpose.msra.mxu0 0.0
    %258 = vmatpush.xpose.msra.mxu0 0.0
    %259 = vmatpush.xpose.msra.mxu0 %v242
    %260 = vmatmul.f32.gmra.mxu0 %v240
    %v261 = vpop.f32.mrf.mxu0
    %v262 = vadd.f32 %v191, %v261
    %263 = vdwg.mxu0
    %265 = vrot.lane.b32.xlu0 %v231, 96
    %v266 = vpop.permute.xlu0 %265
    %v268 = vsel %vm238, %v234, 0
    %v270 = vsel %vm238, %v266, 0
    %272 = vmatpush.xpose.msra.mxu0 0.0
    %273 = vmatpush.xpose.msra.mxu0 0.0
    %274 = vmatpush.xpose.msra.mxu0 0.0
    %275 = vmatpush.xpose.msra.mxu0 0.0
    %276 = vmatpush.xpose.msra.mxu0 0.0
    %277 = vmatpush.xpose.msra.mxu0 0.0
    %278 = vmatpush.xpose.msra.mxu0 0.0
    %279 = vmatpush.xpose.msra.mxu0 0.0
    %280 = vmatpush.xpose.msra.mxu0 0.0
    %281 = vmatpush.xpose.msra.mxu0 0.0
    %282 = vmatpush.xpose.msra.mxu0 0.0
    %283 = vmatpush.xpose.msra.mxu0 0.0
    %284 = vmatpush.xpose.msra.mxu0 0.0
    %285 = vmatpush.xpose.msra.mxu0 0.0
    %286 = vmatpush.xpose.msra.mxu0 0.0
    %287 = vmatpush.xpose.msra.mxu0 %v270
    %288 = vmatmul.f32.gmra.mxu0 %v268
    %v289 = vpop.f32.mrf.mxu0
    %v290 = vadd.f32 %v192, %v289
    %291 = vdwg.mxu0
    %v292 = vsel %vm238, %v262, -inf
    %293 = vmax.xlane.f32.xlu0 %v292
    %v294 = vpop.xlane.xlu0 %293
    %v295 = vsel %vm238, %v290, -inf
    %296 = vmax.xlane.f32.xlu0 %v295
    %v297 = vpop.xlane.xlu0 %296
    %v298 = vsub.f32 %v262, %v294
    %v299 = vsub.f32 %v290, %v297
    %v300 = vmul.f32 %v298, 1.442695
    %v301 = vpow.pop %v300
    %v302 = vmul.f32 %v299, 1.442695
    %v303 = vpow.pop %v302
    %v304 = vsel %vm238, %v301, 0.0
    %305 = vadd.xlane.f32.xlu0 %v304
    %v306 = vpop.xlane.xlu0 %305
    %v307 = vsel %vm238, %v303, 0.0
    %308 = vadd.xlane.f32.xlu0 %v307
    %v309 = vpop.xlane.xlu0 %308
    %v310 = vrcp.pop %v306
    %v311 = vrcp.pop %v309
    %v312 = vmul.f32 %v301, %v310
    %v313 = vmul.f32 %v303, %v311
    %314 = vrot.lane.b32.xlu0 %v228, 64
    %v315 = vpop.permute.xlu0 %314
    %v318 = vsel %vm238, %v312, 0
    %320 = vmatpush.msra.mxu0 0.0
    %321 = vmatpush.msra.mxu0 0.0
    %322 = vmatpush.msra.mxu0 0.0
    %323 = vmatpush.msra.mxu0 0.0
    %324 = vmatpush.msra.mxu0 0.0
    %325 = vmatpush.msra.mxu0 0.0
    %326 = vmatpush.msra.mxu0 0.0
    %327 = vmatpush.msra.mxu0 0.0
    %328 = vmatpush.msra.mxu0 0.0
    %329 = vmatpush.msra.mxu0 0.0
    %330 = vmatpush.msra.mxu0 0.0
    %331 = vmatpush.msra.mxu0 0.0
    %332 = vmatpush.msra.mxu0 0.0
    %333 = vmatpush.msra.mxu0 0.0
    %334 = vmatpush.msra.mxu0 0.0
    %335 = vmatpush.msra.mxu0 %v315
    %336 = vmatmul.f32.gmra.mxu0 %v318
    %v337 = vpop.f32.mrf.mxu0
    %v338 = vadd.f32 0.0, %v337
    %339 = vdwg.mxu0
    %340 = vrot.lane.b32.xlu0 %v231, 64
    %v341 = vpop.permute.xlu0 %340
    %v344 = vsel %vm238, %v313, 0
    %346 = vmatpush.msra.mxu0 0.0
    %347 = vmatpush.msra.mxu0 0.0
    %348 = vmatpush.msra.mxu0 0.0
    %349 = vmatpush.msra.mxu0 0.0
    %350 = vmatpush.msra.mxu0 0.0
    %351 = vmatpush.msra.mxu0 0.0
    %352 = vmatpush.msra.mxu0 0.0
    %353 = vmatpush.msra.mxu0 0.0
    %354 = vmatpush.msra.mxu0 0.0
    %355 = vmatpush.msra.mxu0 0.0
    %356 = vmatpush.msra.mxu0 0.0
    %357 = vmatpush.msra.mxu0 0.0
    %358 = vmatpush.msra.mxu0 0.0
    %359 = vmatpush.msra.mxu0 0.0
    %360 = vmatpush.msra.mxu0 0.0
    %361 = vmatpush.msra.mxu0 %v341
    %362 = vmatmul.f32.gmra.mxu0 %v344
    %v363 = vpop.f32.mrf.mxu0
    %v364 = vadd.f32 0.0, %v363
    %365 = vdwg.mxu0
    %366 = vrot.lane.b32.xlu0 %v233, 120
    %v367 = vpop.permute.xlu0 %366
    %368 = vrot.lane.b32.xlu0 %v228, 88
    %v369 = vpop.permute.xlu0 %368
    %v370 = vsel %vm238, %v367, 0
    %v372 = vsel %vm238, %v369, 0
    %374 = vmatpush.xpose.msra.mxu0 0.0
    %375 = vmatpush.xpose.msra.mxu0 0.0
    %376 = vmatpush.xpose.msra.mxu0 0.0
    %377 = vmatpush.xpose.msra.mxu0 0.0
    %378 = vmatpush.xpose.msra.mxu0 0.0
    %379 = vmatpush.xpose.msra.mxu0 0.0
    %380 = vmatpush.xpose.msra.mxu0 0.0
    %381 = vmatpush.xpose.msra.mxu0 0.0
    %382 = vmatpush.xpose.msra.mxu0 0.0
    %383 = vmatpush.xpose.msra.mxu0 0.0
    %384 = vmatpush.xpose.msra.mxu0 0.0
    %385 = vmatpush.xpose.msra.mxu0 0.0
    %386 = vmatpush.xpose.msra.mxu0 0.0
    %387 = vmatpush.xpose.msra.mxu0 0.0
    %388 = vmatpush.xpose.msra.mxu0 0.0
    %389 = vmatpush.xpose.msra.mxu0 %v372
    %390 = vmatmul.f32.gmra.mxu0 %v370
    %v391 = vpop.f32.mrf.mxu0
    %v392 = vadd.f32 %v191, %v391
    %393 = vdwg.mxu0
    %394 = vrot.lane.b32.xlu0 %v234, 120
    %v395 = vpop.permute.xlu0 %394
    %396 = vrot.lane.b32.xlu0 %v231, 88
    %v397 = vpop.permute.xlu0 %396
    %v398 = vsel %vm238, %v395, 0
    %v400 = vsel %vm238, %v397, 0
    %402 = vmatpush.xpose.msra.mxu0 0.0
    %403 = vmatpush.xpose.msra.mxu0 0.0
    %404 = vmatpush.xpose.msra.mxu0 0.0
    %405 = vmatpush.xpose.msra.mxu0 0.0
    %406 = vmatpush.xpose.msra.mxu0 0.0
    %407 = vmatpush.xpose.msra.mxu0 0.0
    %408 = vmatpush.xpose.msra.mxu0 0.0
    %409 = vmatpush.xpose.msra.mxu0 0.0
    %410 = vmatpush.xpose.msra.mxu0 0.0
    %411 = vmatpush.xpose.msra.mxu0 0.0
    %412 = vmatpush.xpose.msra.mxu0 0.0
    %413 = vmatpush.xpose.msra.mxu0 0.0
    %414 = vmatpush.xpose.msra.mxu0 0.0
    %415 = vmatpush.xpose.msra.mxu0 0.0
    %416 = vmatpush.xpose.msra.mxu0 0.0
    %417 = vmatpush.xpose.msra.mxu0 %v400
    %418 = vmatmul.f32.gmra.mxu0 %v398
    %v419 = vpop.f32.mrf.mxu0
    %v420 = vadd.f32 %v192, %v419
    %421 = vdwg.mxu0
    %v422 = vsel %vm238, %v392, -inf
    %423 = vmax.xlane.f32.xlu0 %v422
    %v424 = vpop.xlane.xlu0 %423
    %v425 = vsel %vm238, %v420, -inf
    %426 = vmax.xlane.f32.xlu0 %v425
    %v427 = vpop.xlane.xlu0 %426
    %v428 = vsub.f32 %v392, %v424
    %v429 = vsub.f32 %v420, %v427
    %v430 = vmul.f32 %v428, 1.442695
    %v431 = vpow.pop %v430
    %v432 = vmul.f32 %v429, 1.442695
    %v433 = vpow.pop %v432
    %v434 = vsel %vm238, %v431, 0.0
    %435 = vadd.xlane.f32.xlu0 %v434
    %v436 = vpop.xlane.xlu0 %435
    %v437 = vsel %vm238, %v433, 0.0
    %438 = vadd.xlane.f32.xlu0 %v437
    %v439 = vpop.xlane.xlu0 %438
    %v440 = vrcp.pop %v436
    %v441 = vrcp.pop %v439
    %v442 = vmul.f32 %v431, %v440
    %v443 = vmul.f32 %v433, %v441
    %444 = vrot.lane.b32.xlu0 %v228, 56
    %v445 = vpop.permute.xlu0 %444
    %v448 = vsel %vm238, %v442, 0
    %450 = vmatpush.msra.mxu0 0.0
    %451 = vmatpush.msra.mxu0 0.0
    %452 = vmatpush.msra.mxu0 0.0
    %453 = vmatpush.msra.mxu0 0.0
    %454 = vmatpush.msra.mxu0 0.0
    %455 = vmatpush.msra.mxu0 0.0
    %456 = vmatpush.msra.mxu0 0.0
    %457 = vmatpush.msra.mxu0 0.0
    %458 = vmatpush.msra.mxu0 0.0
    %459 = vmatpush.msra.mxu0 0.0
    %460 = vmatpush.msra.mxu0 0.0
    %461 = vmatpush.msra.mxu0 0.0
    %462 = vmatpush.msra.mxu0 0.0
    %463 = vmatpush.msra.mxu0 0.0
    %464 = vmatpush.msra.mxu0 0.0
    %465 = vmatpush.msra.mxu0 %v445
    %466 = vmatmul.f32.gmra.mxu0 %v448
    %v467 = vpop.f32.mrf.mxu0
    %v468 = vadd.f32 0.0, %v467
    %469 = vdwg.mxu0
    %470 = vrot.lane.b32.xlu0 %v231, 56
    %v471 = vpop.permute.xlu0 %470
    %v474 = vsel %vm238, %v443, 0
    %476 = vmatpush.msra.mxu0 0.0
    %477 = vmatpush.msra.mxu0 0.0
    %478 = vmatpush.msra.mxu0 0.0
    %479 = vmatpush.msra.mxu0 0.0
    %480 = vmatpush.msra.mxu0 0.0
    %481 = vmatpush.msra.mxu0 0.0
    %482 = vmatpush.msra.mxu0 0.0
    %483 = vmatpush.msra.mxu0 0.0
    %484 = vmatpush.msra.mxu0 0.0
    %485 = vmatpush.msra.mxu0 0.0
    %486 = vmatpush.msra.mxu0 0.0
    %487 = vmatpush.msra.mxu0 0.0
    %488 = vmatpush.msra.mxu0 0.0
    %489 = vmatpush.msra.mxu0 0.0
    %490 = vmatpush.msra.mxu0 0.0
    %491 = vmatpush.msra.mxu0 %v471
    %492 = vmatmul.f32.gmra.mxu0 %v474
    %v493 = vpop.f32.mrf.mxu0
    %v494 = vadd.f32 0.0, %v493
    %495 = vdwg.mxu0
    %496 = vrot.lane.b32.xlu0 %v233, 112
    %v497 = vpop.permute.xlu0 %496
    %498 = vrot.lane.b32.xlu0 %v228, 80
    %v499 = vpop.permute.xlu0 %498
    %v500 = vsel %vm238, %v497, 0
    %v502 = vsel %vm238, %v499, 0
    %504 = vmatpush.xpose.msra.mxu0 0.0
    %505 = vmatpush.xpose.msra.mxu0 0.0
    %506 = vmatpush.xpose.msra.mxu0 0.0
    %507 = vmatpush.xpose.msra.mxu0 0.0
    %508 = vmatpush.xpose.msra.mxu0 0.0
    %509 = vmatpush.xpose.msra.mxu0 0.0
    %510 = vmatpush.xpose.msra.mxu0 0.0
    %511 = vmatpush.xpose.msra.mxu0 0.0
    %512 = vmatpush.xpose.msra.mxu0 0.0
    %513 = vmatpush.xpose.msra.mxu0 0.0
    %514 = vmatpush.xpose.msra.mxu0 0.0
    %515 = vmatpush.xpose.msra.mxu0 0.0
    %516 = vmatpush.xpose.msra.mxu0 0.0
    %517 = vmatpush.xpose.msra.mxu0 0.0
    %518 = vmatpush.xpose.msra.mxu0 0.0
    %519 = vmatpush.xpose.msra.mxu0 %v502
    %520 = vmatmul.f32.gmra.mxu0 %v500
    %v521 = vpop.f32.mrf.mxu0
    %v522 = vadd.f32 %v191, %v521
    %523 = vdwg.mxu0
    %524 = vrot.lane.b32.xlu0 %v234, 112
    %v525 = vpop.permute.xlu0 %524
    %526 = vrot.lane.b32.xlu0 %v231, 80
    %v527 = vpop.permute.xlu0 %526
    %v528 = vsel %vm238, %v525, 0
    %v530 = vsel %vm238, %v527, 0
    %532 = vmatpush.xpose.msra.mxu0 0.0
    %533 = vmatpush.xpose.msra.mxu0 0.0
    %534 = vmatpush.xpose.msra.mxu0 0.0
    %535 = vmatpush.xpose.msra.mxu0 0.0
    %536 = vmatpush.xpose.msra.mxu0 0.0
    %537 = vmatpush.xpose.msra.mxu0 0.0
    %538 = vmatpush.xpose.msra.mxu0 0.0
    %539 = vmatpush.xpose.msra.mxu0 0.0
    %540 = vmatpush.xpose.msra.mxu0 0.0
    %541 = vmatpush.xpose.msra.mxu0 0.0
    %542 = vmatpush.xpose.msra.mxu0 0.0
    %543 = vmatpush.xpose.msra.mxu0 0.0
    %544 = vmatpush.xpose.msra.mxu0 0.0
    %545 = vmatpush.xpose.msra.mxu0 0.0
    %546 = vmatpush.xpose.msra.mxu0 0.0
    %547 = vmatpush.xpose.msra.mxu0 %v530
    %548 = vmatmul.f32.gmra.mxu0 %v528
    %v549 = vpop.f32.mrf.mxu0
    %v550 = vadd.f32 %v192, %v549
    %551 = vdwg.mxu0
    %v552 = vsel %vm238, %v522, -inf
    %553 = vmax.xlane.f32.xlu0 %v552
    %v554 = vpop.xlane.xlu0 %553
    %v555 = vsel %vm238, %v550, -inf
    %556 = vmax.xlane.f32.xlu0 %v555
    %v557 = vpop.xlane.xlu0 %556
    %v558 = vsub.f32 %v522, %v554
    %v559 = vsub.f32 %v550, %v557
    %v560 = vmul.f32 %v558, 1.442695
    %v561 = vpow.pop %v560
    %v562 = vmul.f32 %v559, 1.442695
    %v563 = vpow.pop %v562
    %v564 = vsel %vm238, %v561, 0.0
    %565 = vadd.xlane.f32.xlu0 %v564
    %v566 = vpop.xlane.xlu0 %565
    %v567 = vsel %vm238, %v563, 0.0
    %568 = vadd.xlane.f32.xlu0 %v567
    %v569 = vpop.xlane.xlu0 %568
    %v570 = vrcp.pop %v566
    %v571 = vrcp.pop %v569
    %v572 = vmul.f32 %v561, %v570
    %v573 = vmul.f32 %v563, %v571
    %574 = vrot.lane.b32.xlu0 %v228, 48
    %v575 = vpop.permute.xlu0 %574
    %v578 = vsel %vm238, %v572, 0
    %580 = vmatpush.msra.mxu0 0.0
    %581 = vmatpush.msra.mxu0 0.0
    %582 = vmatpush.msra.mxu0 0.0
    %583 = vmatpush.msra.mxu0 0.0
    %584 = vmatpush.msra.mxu0 0.0
    %585 = vmatpush.msra.mxu0 0.0
    %586 = vmatpush.msra.mxu0 0.0
    %587 = vmatpush.msra.mxu0 0.0
    %588 = vmatpush.msra.mxu0 0.0
    %589 = vmatpush.msra.mxu0 0.0
    %590 = vmatpush.msra.mxu0 0.0
    %591 = vmatpush.msra.mxu0 0.0
    %592 = vmatpush.msra.mxu0 0.0
    %593 = vmatpush.msra.mxu0 0.0
    %594 = vmatpush.msra.mxu0 0.0
    %595 = vmatpush.msra.mxu0 %v575
    %596 = vmatmul.f32.gmra.mxu0 %v578
    %v597 = vpop.f32.mrf.mxu0
    %v598 = vadd.f32 0.0, %v597
    %599 = vdwg.mxu0
    %600 = vrot.lane.b32.xlu0 %v231, 48
    %v601 = vpop.permute.xlu0 %600
    %v604 = vsel %vm238, %v573, 0
    %606 = vmatpush.msra.mxu0 0.0
    %607 = vmatpush.msra.mxu0 0.0
    %608 = vmatpush.msra.mxu0 0.0
    %609 = vmatpush.msra.mxu0 0.0
    %610 = vmatpush.msra.mxu0 0.0
    %611 = vmatpush.msra.mxu0 0.0
    %612 = vmatpush.msra.mxu0 0.0
    %613 = vmatpush.msra.mxu0 0.0
    %614 = vmatpush.msra.mxu0 0.0
    %615 = vmatpush.msra.mxu0 0.0
    %616 = vmatpush.msra.mxu0 0.0
    %617 = vmatpush.msra.mxu0 0.0
    %618 = vmatpush.msra.mxu0 0.0
    %619 = vmatpush.msra.mxu0 0.0
    %620 = vmatpush.msra.mxu0 0.0
    %621 = vmatpush.msra.mxu0 %v601
    %622 = vmatmul.f32.gmra.mxu0 %v604
    %v623 = vpop.f32.mrf.mxu0
    %v624 = vadd.f32 0.0, %v623
    %625 = vdwg.mxu0
    %626 = vrot.lane.b32.xlu0 %v233, 104
    %v627 = vpop.permute.xlu0 %626
    %628 = vrot.lane.b32.xlu0 %v228, 72
    %v629 = vpop.permute.xlu0 %628
    %v630 = vsel %vm238, %v627, 0
    %v632 = vsel %vm238, %v629, 0
    %634 = vmatpush.xpose.msra.mxu0 0.0
    %635 = vmatpush.xpose.msra.mxu0 0.0
    %636 = vmatpush.xpose.msra.mxu0 0.0
    %637 = vmatpush.xpose.msra.mxu0 0.0
    %638 = vmatpush.xpose.msra.mxu0 0.0
    %639 = vmatpush.xpose.msra.mxu0 0.0
    %640 = vmatpush.xpose.msra.mxu0 0.0
    %641 = vmatpush.xpose.msra.mxu0 0.0
    %642 = vmatpush.xpose.msra.mxu0 0.0
    %643 = vmatpush.xpose.msra.mxu0 0.0
    %644 = vmatpush.xpose.msra.mxu0 0.0
    %645 = vmatpush.xpose.msra.mxu0 0.0
    %646 = vmatpush.xpose.msra.mxu0 0.0
    %647 = vmatpush.xpose.msra.mxu0 0.0
    %648 = vmatpush.xpose.msra.mxu0 0.0
    %649 = vmatpush.xpose.msra.mxu0 %v632
    %650 = vmatmul.f32.gmra.mxu0 %v630
    %v651 = vpop.f32.mrf.mxu0
    %v652 = vadd.f32 %v191, %v651
    %653 = vdwg.mxu0
    %654 = vrot.lane.b32.xlu0 %v234, 104
    %v655 = vpop.permute.xlu0 %654
    %656 = vrot.lane.b32.xlu0 %v231, 72
    %v657 = vpop.permute.xlu0 %656
    %v658 = vsel %vm238, %v655, 0
    %v660 = vsel %vm238, %v657, 0
    %662 = vmatpush.xpose.msra.mxu0 0.0
    %663 = vmatpush.xpose.msra.mxu0 0.0
    %664 = vmatpush.xpose.msra.mxu0 0.0
    %665 = vmatpush.xpose.msra.mxu0 0.0
    %666 = vmatpush.xpose.msra.mxu0 0.0
    %667 = vmatpush.xpose.msra.mxu0 0.0
    %668 = vmatpush.xpose.msra.mxu0 0.0
    %669 = vmatpush.xpose.msra.mxu0 0.0
    %670 = vmatpush.xpose.msra.mxu0 0.0
    %671 = vmatpush.xpose.msra.mxu0 0.0
    %672 = vmatpush.xpose.msra.mxu0 0.0
    %673 = vmatpush.xpose.msra.mxu0 0.0
    %674 = vmatpush.xpose.msra.mxu0 0.0
    %675 = vmatpush.xpose.msra.mxu0 0.0
    %676 = vmatpush.xpose.msra.mxu0 0.0
    %677 = vmatpush.xpose.msra.mxu0 %v660
    %678 = vmatmul.f32.gmra.mxu0 %v658
    %v679 = vpop.f32.mrf.mxu0
    %v680 = vadd.f32 %v192, %v679
    %681 = vdwg.mxu0
    %v682 = vsel %vm238, %v652, -inf
    %683 = vmax.xlane.f32.xlu0 %v682
    %v684 = vpop.xlane.xlu0 %683
    %v685 = vsel %vm238, %v680, -inf
    %686 = vmax.xlane.f32.xlu0 %v685
    %v687 = vpop.xlane.xlu0 %686
    %v688 = vsub.f32 %v652, %v684
    %v689 = vsub.f32 %v680, %v687
    %v690 = vmul.f32 %v688, 1.442695
    %v691 = vpow.pop %v690
    %v692 = vmul.f32 %v689, 1.442695
    %v693 = vpow.pop %v692
    %v694 = vsel %vm238, %v691, 0.0
    %695 = vadd.xlane.f32.xlu0 %v694
    %v696 = vpop.xlane.xlu0 %695
    %v697 = vsel %vm238, %v693, 0.0
    %698 = vadd.xlane.f32.xlu0 %v697
    %v699 = vpop.xlane.xlu0 %698
    %v700 = vrcp.pop %v696
    %v701 = vrcp.pop %v699
    %v702 = vmul.f32 %v691, %v700
    %v703 = vmul.f32 %v693, %v701
    %704 = vrot.lane.b32.xlu0 %v228, 40
    %v705 = vpop.permute.xlu0 %704
    %v708 = vsel %vm238, %v702, 0
    %710 = vmatpush.msra.mxu0 0.0
    %711 = vmatpush.msra.mxu0 0.0
    %712 = vmatpush.msra.mxu0 0.0
    %713 = vmatpush.msra.mxu0 0.0
    %714 = vmatpush.msra.mxu0 0.0
    %715 = vmatpush.msra.mxu0 0.0
    %716 = vmatpush.msra.mxu0 0.0
    %717 = vmatpush.msra.mxu0 0.0
    %718 = vmatpush.msra.mxu0 0.0
    %719 = vmatpush.msra.mxu0 0.0
    %720 = vmatpush.msra.mxu0 0.0
    %721 = vmatpush.msra.mxu0 0.0
    %722 = vmatpush.msra.mxu0 0.0
    %723 = vmatpush.msra.mxu0 0.0
    %724 = vmatpush.msra.mxu0 0.0
    %725 = vmatpush.msra.mxu0 %v705
    %726 = vmatmul.f32.gmra.mxu0 %v708
    %v727 = vpop.f32.mrf.mxu0
    %v728 = vadd.f32 0.0, %v727
    %729 = vdwg.mxu0
    %730 = vrot.lane.b32.xlu0 %v231, 40
    %v731 = vpop.permute.xlu0 %730
    %v734 = vsel %vm238, %v703, 0
    %736 = vmatpush.msra.mxu0 0.0
    %737 = vmatpush.msra.mxu0 0.0
    %738 = vmatpush.msra.mxu0 0.0
    %739 = vmatpush.msra.mxu0 0.0
    %740 = vmatpush.msra.mxu0 0.0
    %741 = vmatpush.msra.mxu0 0.0
    %742 = vmatpush.msra.mxu0 0.0
    %743 = vmatpush.msra.mxu0 0.0
    %744 = vmatpush.msra.mxu0 0.0
    %745 = vmatpush.msra.mxu0 0.0
    %746 = vmatpush.msra.mxu0 0.0
    %747 = vmatpush.msra.mxu0 0.0
    %748 = vmatpush.msra.mxu0 0.0
    %749 = vmatpush.msra.mxu0 0.0
    %750 = vmatpush.msra.mxu0 0.0
    %751 = vmatpush.msra.mxu0 %v731
    %752 = vmatmul.f32.gmra.mxu0 %v734
    %v753 = vpop.f32.mrf.mxu0
    %v754 = vadd.f32 0.0, %v753
    %755 = vdwg.mxu0
    %758 = vrot.lane.b32.xlu0 %v468, 8
    %v759 = vpop.permute.xlu0 %758
    %760 = vrot.lane.b32.xlu0 %v494, 8
    %v761 = vpop.permute.xlu0 %760
    %766 = vrot.lane.b32.xlu0 %v598, 16
    %v767 = vpop.permute.xlu0 %766
    %768 = vrot.lane.b32.xlu0 %v624, 16
    %v769 = vpop.permute.xlu0 %768
    %774 = vrot.lane.b32.xlu0 %v728, 24
    %v775 = vpop.permute.xlu0 %774
    %776 = vrot.lane.b32.xlu0 %v754, 24
    %v777 = vpop.permute.xlu0 %776
    %v780 = vsel %vm238, %v338, %v759
    %v781 = vsel %vm238, %v364, %v761
    %vm782 = vcmask 130048
    %v783 = vsel %vm782, %v780, %v767
    %v784 = vsel %vm782, %v781, %v769
    %vm785 = vcmask 195584
    %v786 = vsel %vm785, %v783, %v775
    %v787 = vsel %vm785, %v784, %v777
    %v788 = vld [vmem:[%s6] sm:$0xff]
    %v789 = vld [vmem:[%s6 + $0x8] sm:$0xff]
    %v790 = vld [vmem:[%s6 + $0x10] sm:$0xff]
    %v791 = vld [vmem:[%s6 + $0x18] sm:$0xff]
    %v792 = vld [vmem:[%s7] sm:$0x1]
    %v794 = vperm.slane %v792, 0
    %v797 = vsel %vm203, %v786, 0
    %v800 = vsel %vm203, %v787, 0
    %802 = vmatpush.msra.mxu0 0.0
    %803 = vmatpush.msra.mxu0 0.0
    %804 = vmatpush.msra.mxu0 0.0
    %805 = vmatpush.msra.mxu0 0.0
    %806 = vmatpush.msra.mxu0 0.0
    %807 = vmatpush.msra.mxu0 0.0
    %808 = vmatpush.msra.mxu0 0.0
    %809 = vmatpush.msra.mxu0 0.0
    %810 = vmatpush.msra.mxu0 0.0
    %811 = vmatpush.msra.mxu0 0.0
    %812 = vmatpush.msra.mxu0 0.0
    %813 = vmatpush.msra.mxu0 0.0
    %814 = vmatpush.msra.mxu0 %v791
    %815 = vmatpush.msra.mxu0 %v790
    %816 = vmatpush.msra.mxu0 %v789
    %817 = vmatpush.msra.mxu0 %v788
    %818 = vmatmul.f32.gmra.mxu0 %v797
    %v819 = vpop.f32.mrf.mxu0
    %v820 = vadd.f32 %v794, %v819
    %821 = vmatmul.f32.gmra.mxu0 %v800
    %v822 = vpop.f32.mrf.mxu0
    %v823 = vadd.f32 %v794, %v822
    %824 = vdwg.mxu0
    %v825 = vadd.f32 %v187, %v820
    %v826 = vadd.f32 %v188, %v823
    %v827 = vsel %vm203, %v825, 0.0
    %828 = vadd.xlane.f32.xlu0 %v827
    %v829 = vpop.xlane.xlu0 %828
    %v830 = vsel %vm203, %v826, 0.0
    %831 = vadd.xlane.f32.xlu0 %v830
    %v832 = vpop.xlane.xlu0 %831
    %v833 = vmul.f32 %v825, %v825
    %v834 = vmul.f32 %v826, %v826
    %v835 = vsel %vm203, %v833, 0.0
    %836 = vadd.xlane.f32.xlu0 %v835
    %v837 = vpop.xlane.xlu0 %836
    %v838 = vsel %vm203, %v834, 0.0
    %839 = vadd.xlane.f32.xlu0 %v838
    %v840 = vpop.xlane.xlu0 %839
    %v841 = vmul.f32 %v829, 0.03125
    %v842 = vmul.f32 %v832, 0.03125
    %v843 = vmul.f32 %v837, 0.03125
    %v844 = vmul.f32 %v840, 0.03125
    %v845 = vmul.f32 %v841, %v841
    %v846 = vmul.f32 %v842, %v842
    %v847 = vsub.f32 %v843, %v845
    %v848 = vsub.f32 %v844, %v846
    %v849 = vsub.f32 %v825, %v841
    %v850 = vsub.f32 %v826, %v842
    %v851 = vadd.f32 %v847, 1e-05
    %v852 = vadd.f32 %v848, 1e-05
    %v853 = vrsqrt.pop %v851
    %v854 = vmul.f32 %v853, %v851
    %v855 = vmul.f32 %v854, %v853
    %v856 = vmul.f32 0.5, %v855
    %v857 = vsub.f32 1.5, %v856
    %v858 = vmul.f32 %v853, %v857
    %vm859 = vweird.f32 %v851
    %vm860 = vweird.f32 %v853
    %vm861 = vmor %vm859, %vm860
    %v862 = vsel %vm861, %v853, %v858
    %v863 = vrsqrt.pop %v852
    %v864 = vmul.f32 %v863, %v852
    %v865 = vmul.f32 %v864, %v863
    %v866 = vmul.f32 0.5, %v865
    %v867 = vsub.f32 1.5, %v866
    %v868 = vmul.f32 %v863, %v867
    %vm869 = vweird.f32 %v852
    %vm870 = vweird.f32 %v863
    %vm871 = vmor %vm869, %vm870
    %v872 = vsel %vm871, %v863, %v868
    %v873 = vmul.f32 %v849, %v862
    %v874 = vmul.f32 %v850, %v872
    %v875 = vld [vmem:[%s8] sm:$0x1]
    %v877 = vperm.slane %v875, 0
    %v879 = vmul.f32 %v873, %v877
    %v880 = vmul.f32 %v874, %v877
    %v881 = vld [vmem:[%s9] sm:$0x1]
    %v883 = vperm.slane %v881, 0
    %v885 = vadd.f32 %v879, %v883
    %v886 = vadd.f32 %v880, %v883
    %v887 = vld [vmem:[%s10] sm:$0xff]
    %v888 = vld [vmem:[%s10 + $0x8] sm:$0xff]
    %v889 = vld [vmem:[%s10 + $0x10] sm:$0xff]
    %v890 = vld [vmem:[%s10 + $0x18] sm:$0xff]
    %v891 = vld [vmem:[%s11] sm:$0x1]
    %v893 = vperm.slane %v891, 0
    %v896 = vsel %vm203, %v885, 0
    %v899 = vsel %vm203, %v886, 0
    %901 = vmatpush.msra.mxu0 0.0
    %902 = vmatpush.msra.mxu0 0.0
    %903 = vmatpush.msra.mxu0 0.0
    %904 = vmatpush.msra.mxu0 0.0
    %905 = vmatpush.msra.mxu0 0.0
    %906 = vmatpush.msra.mxu0 0.0
    %907 = vmatpush.msra.mxu0 0.0
    %908 = vmatpush.msra.mxu0 0.0
    %909 = vmatpush.msra.mxu0 0.0
    %910 = vmatpush.msra.mxu0 0.0
    %911 = vmatpush.msra.mxu0 0.0
    %912 = vmatpush.msra.mxu0 0.0
    %913 = vmatpush.msra.mxu0 %v890
    %914 = vmatpush.msra.mxu0 %v889
    %915 = vmatpush.msra.mxu0 %v888
    %916 = vmatpush.msra.mxu0 %v887
    %917 = vmatmul.f32.gmra.mxu0 %v896
    %v918 = vpop.f32.mrf.mxu0
    %v919 = vadd.f32 %v893, %v918
    %920 = vmatmul.f32.gmra.mxu0 %v899
    %v921 = vpop.f32.mrf.mxu0
    %v922 = vadd.f32 %v893, %v921
    %923 = vdwg.mxu0
    %v924 = vld [vmem:[#allocation10] sm:$0xff]
    %v925 = vld [vmem:[#allocation10 + $0x8] sm:$0xff]
    %v926 = vld [vmem:[#allocation10 + $0x10] sm:$0xff]
    %v927 = vld [vmem:[#allocation10 + $0x18] sm:$0xff]
    %v928 = vld [vmem:[%s13] sm:$0x1]
    %v930 = vperm.slane %v928, 0
    %v933 = vsel %vm203, %v189, 0
    %v936 = vsel %vm203, %v190, 0
    %938 = vmatpush.msra.mxu0 0.0
    %939 = vmatpush.msra.mxu0 0.0
    %940 = vmatpush.msra.mxu0 0.0
    %941 = vmatpush.msra.mxu0 0.0
    %942 = vmatpush.msra.mxu0 0.0
    %943 = vmatpush.msra.mxu0 0.0
    %944 = vmatpush.msra.mxu0 0.0
    %945 = vmatpush.msra.mxu0 0.0
    %946 = vmatpush.msra.mxu0 0.0
    %947 = vmatpush.msra.mxu0 0.0
    %948 = vmatpush.msra.mxu0 0.0
    %949 = vmatpush.msra.mxu0 0.0
    %950 = vmatpush.msra.mxu0 %v927
    %951 = vmatpush.msra.mxu0 %v926
    %952 = vmatpush.msra.mxu0 %v925
    %953 = vmatpush.msra.mxu0 %v924
    %954 = vmatmul.f32.gmra.mxu0 %v933
    %v955 = vpop.f32.mrf.mxu0
    %v956 = vadd.f32 %v930, %v955
    %957 = vmatmul.f32.gmra.mxu0 %v936
    %v958 = vpop.f32.mrf.mxu0
    %v959 = vadd.f32 %v930, %v958
    %960 = vdwg.mxu0
    %v961 = vmul.f32 %v919, 0.35355338
    %v962 = vmul.f32 %v922, 0.35355338
    %v965 = vperm.slane %v193, 0
    %v966 = vperm.slane %v194, 0
    %v970 = vsel %vm238, %v961, 0
    %v973 = vsel %vm238, %v956, 0
    %975 = vmatpush.xpose.msra.mxu0 0.0
    %976 = vmatpush.xpose.msra.mxu0 0.0
    %977 = vmatpush.xpose.msra.mxu0 0.0
    %978 = vmatpush.xpose.msra.mxu0 0.0
    %979 = vmatpush.xpose.msra.mxu0 0.0
    %980 = vmatpush.xpose.msra.mxu0 0.0
    %981 = vmatpush.xpose.msra.mxu0 0.0
    %982 = vmatpush.xpose.msra.mxu0 0.0
    %983 = vmatpush.xpose.msra.mxu0 0.0
    %984 = vmatpush.xpose.msra.mxu0 0.0
    %985 = vmatpush.xpose.msra.mxu0 0.0
    %986 = vmatpush.xpose.msra.mxu0 0.0
    %987 = vmatpush.xpose.msra.mxu0 0.0
    %988 = vmatpush.xpose.msra.mxu0 0.0
    %989 = vmatpush.xpose.msra.mxu0 0.0
    %990 = vmatpush.xpose.msra.mxu0 %v973
    %991 = vmatmul.f32.gmra.mxu0 %v970
    %v992 = vpop.f32.mrf.mxu0
    %v993 = vadd.f32 %v965, %v992
    %994 = vdwg.mxu0
    %v996 = vsel %vm238, %v962, 0
    %v999 = vsel %vm238, %v959, 0
    %1001 = vmatpush.xpose.msra.mxu0 0.0
    %1002 = vmatpush.xpose.msra.mxu0 0.0
    %1003 = vmatpush.xpose.msra.mxu0 0.0
    %1004 = vmatpush.xpose.msra.mxu0 0.0
    %1005 = vmatpush.xpose.msra.mxu0 0.0
    %1006 = vmatpush.xpose.msra.mxu0 0.0
    %1007 = vmatpush.xpose.msra.mxu0 0.0
    %1008 = vmatpush.xpose.msra.mxu0 0.0
    %1009 = vmatpush.xpose.msra.mxu0 0.0
    %1010 = vmatpush.xpose.msra.mxu0 0.0
    %1011 = vmatpush.xpose.msra.mxu0 0.0
    %1012 = vmatpush.xpose.msra.mxu0 0.0
    %1013 = vmatpush.xpose.msra.mxu0 0.0
    %1014 = vmatpush.xpose.msra.mxu0 0.0
    %1015 = vmatpush.xpose.msra.mxu0 0.0
    %1016 = vmatpush.xpose.msra.mxu0 %v999
    %1017 = vmatmul.f32.gmra.mxu0 %v996
    %v1018 = vpop.f32.mrf.mxu0
    %v1019 = vadd.f32 %v966, %v1018
    %1020 = vdwg.mxu0
    %v1021 = vsel %vm238, %v993, -inf
    %1022 = vmax.xlane.f32.xlu0 %v1021
    %v1023 = vpop.xlane.xlu0 %1022
    %v1024 = vsel %vm238, %v1019, -inf
    %1025 = vmax.xlane.f32.xlu0 %v1024
    %v1026 = vpop.xlane.xlu0 %1025
    %v1027 = vsub.f32 %v993, %v1023
    %v1028 = vsub.f32 %v1019, %v1026
    %v1029 = vmul.f32 %v1027, 1.442695
    %v1030 = vpow.pop %v1029
    %v1031 = vmul.f32 %v1028, 1.442695
    %v1032 = vpow.pop %v1031
    %v1033 = vsel %vm238, %v1030, 0.0
    %1034 = vadd.xlane.f32.xlu0 %v1033
    %v1035 = vpop.xlane.xlu0 %1034
    %v1036 = vsel %vm238, %v1032, 0.0
    %1037 = vadd.xlane.f32.xlu0 %v1036
    %v1038 = vpop.xlane.xlu0 %1037
    %v1039 = vrcp.pop %v1035
    %v1040 = vrcp.pop %v1038
    %v1041 = vmul.f32 %v1030, %v1039
    %v1042 = vmul.f32 %v1032, %v1040
    %1043 = vrot.lane.b32.xlu0 %v956, 96
    %v1044 = vpop.permute.xlu0 %1043
    %v1047 = vsel %vm238, %v1041, 0
    %1049 = vmatpush.msra.mxu0 0.0
    %1050 = vmatpush.msra.mxu0 0.0
    %1051 = vmatpush.msra.mxu0 0.0
    %1052 = vmatpush.msra.mxu0 0.0
    %1053 = vmatpush.msra.mxu0 0.0
    %1054 = vmatpush.msra.mxu0 0.0
    %1055 = vmatpush.msra.mxu0 0.0
    %1056 = vmatpush.msra.mxu0 0.0
    %1057 = vmatpush.msra.mxu0 0.0
    %1058 = vmatpush.msra.mxu0 0.0
    %1059 = vmatpush.msra.mxu0 0.0
    %1060 = vmatpush.msra.mxu0 0.0
    %1061 = vmatpush.msra.mxu0 0.0
    %1062 = vmatpush.msra.mxu0 0.0
    %1063 = vmatpush.msra.mxu0 0.0
    %1064 = vmatpush.msra.mxu0 %v1044
    %1065 = vmatmul.f32.gmra.mxu0 %v1047
    %v1066 = vpop.f32.mrf.mxu0
    %v1067 = vadd.f32 0.0, %v1066
    %1068 = vdwg.mxu0
    %1069 = vrot.lane.b32.xlu0 %v959, 96
    %v1070 = vpop.permute.xlu0 %1069
    %v1073 = vsel %vm238, %v1042, 0
    %1075 = vmatpush.msra.mxu0 0.0
    %1076 = vmatpush.msra.mxu0 0.0
    %1077 = vmatpush.msra.mxu0 0.0
    %1078 = vmatpush.msra.mxu0 0.0
    %1079 = vmatpush.msra.mxu0 0.0
    %1080 = vmatpush.msra.mxu0 0.0
    %1081 = vmatpush.msra.mxu0 0.0
    %1082 = vmatpush.msra.mxu0 0.0
    %1083 = vmatpush.msra.mxu0 0.0
    %1084 = vmatpush.msra.mxu0 0.0
    %1085 = vmatpush.msra.mxu0 0.0
    %1086 = vmatpush.msra.mxu0 0.0
    %1087 = vmatpush.msra.mxu0 0.0
    %1088 = vmatpush.msra.mxu0 0.0
    %1089 = vmatpush.msra.mxu0 0.0
    %1090 = vmatpush.msra.mxu0 %v1070
    %1091 = vmatmul.f32.gmra.mxu0 %v1073
    %v1092 = vpop.f32.mrf.mxu0
    %v1093 = vadd.f32 0.0, %v1092
    %1094 = vdwg.mxu0
    %1095 = vrot.lane.b32.xlu0 %v961, 120
    %v1096 = vpop.permute.xlu0 %1095
    %1097 = vrot.lane.b32.xlu0 %v956, 120
    %v1098 = vpop.permute.xlu0 %1097
    %v1099 = vsel %vm238, %v1096, 0
    %v1101 = vsel %vm238, %v1098, 0
    %1103 = vmatpush.xpose.msra.mxu0 0.0
    %1104 = vmatpush.xpose.msra.mxu0 0.0
    %1105 = vmatpush.xpose.msra.mxu0 0.0
    %1106 = vmatpush.xpose.msra.mxu0 0.0
    %1107 = vmatpush.xpose.msra.mxu0 0.0
    %1108 = vmatpush.xpose.msra.mxu0 0.0
    %1109 = vmatpush.xpose.msra.mxu0 0.0
    %1110 = vmatpush.xpose.msra.mxu0 0.0
    %1111 = vmatpush.xpose.msra.mxu0 0.0
    %1112 = vmatpush.xpose.msra.mxu0 0.0
    %1113 = vmatpush.xpose.msra.mxu0 0.0
    %1114 = vmatpush.xpose.msra.mxu0 0.0
    %1115 = vmatpush.xpose.msra.mxu0 0.0
    %1116 = vmatpush.xpose.msra.mxu0 0.0
    %1117 = vmatpush.xpose.msra.mxu0 0.0
    %1118 = vmatpush.xpose.msra.mxu0 %v1101
    %1119 = vmatmul.f32.gmra.mxu0 %v1099
    %v1120 = vpop.f32.mrf.mxu0
    %v1121 = vadd.f32 %v965, %v1120
    %1122 = vdwg.mxu0
    %1123 = vrot.lane.b32.xlu0 %v962, 120
    %v1124 = vpop.permute.xlu0 %1123
    %1125 = vrot.lane.b32.xlu0 %v959, 120
    %v1126 = vpop.permute.xlu0 %1125
    %v1127 = vsel %vm238, %v1124, 0
    %v1129 = vsel %vm238, %v1126, 0
    %1131 = vmatpush.xpose.msra.mxu0 0.0
    %1132 = vmatpush.xpose.msra.mxu0 0.0
    %1133 = vmatpush.xpose.msra.mxu0 0.0
    %1134 = vmatpush.xpose.msra.mxu0 0.0
    %1135 = vmatpush.xpose.msra.mxu0 0.0
    %1136 = vmatpush.xpose.msra.mxu0 0.0
    %1137 = vmatpush.xpose.msra.mxu0 0.0
    %1138 = vmatpush.xpose.msra.mxu0 0.0
    %1139 = vmatpush.xpose.msra.mxu0 0.0
    %1140 = vmatpush.xpose.msra.mxu0 0.0
    %1141 = vmatpush.xpose.msra.mxu0 0.0
    %1142 = vmatpush.xpose.msra.mxu0 0.0
    %1143 = vmatpush.xpose.msra.mxu0 0.0
    %1144 = vmatpush.xpose.msra.mxu0 0.0
    %1145 = vmatpush.xpose.msra.mxu0 0.0
    %1146 = vmatpush.xpose.msra.mxu0 %v1129
    %1147 = vmatmul.f32.gmra.mxu0 %v1127
    %v1148 = vpop.f32.mrf.mxu0
    %v1149 = vadd.f32 %v966, %v1148
    %1150 = vdwg.mxu0
    %v1151 = vsel %vm238, %v1121, -inf
    %1152 = vmax.xlane.f32.xlu0 %v1151
    %v1153 = vpop.xlane.xlu0 %1152
    %v1154 = vsel %vm238, %v1149, -inf
    %1155 = vmax.xlane.f32.xlu0 %v1154
    %v1156 = vpop.xlane.xlu0 %1155
    %v1157 = vsub.f32 %v1121, %v1153
    %v1158 = vsub.f32 %v1149, %v1156
    %v1159 = vmul.f32 %v1157, 1.442695
    %v1160 = vpow.pop %v1159
    %v1161 = vmul.f32 %v1158, 1.442695
    %v1162 = vpow.pop %v1161
    %v1163 = vsel %vm238, %v1160, 0.0
    %1164 = vadd.xlane.f32.xlu0 %v1163
    %v1165 = vpop.xlane.xlu0 %1164
    %v1166 = vsel %vm238, %v1162, 0.0
    %1167 = vadd.xlane.f32.xlu0 %v1166
    %v1168 = vpop.xlane.xlu0 %1167
    %v1169 = vrcp.pop %v1165
    %v1170 = vrcp.pop %v1168
    %v1171 = vmul.f32 %v1160, %v1169
    %v1172 = vmul.f32 %v1162, %v1170
    %1173 = vrot.lane.b32.xlu0 %v956, 88
    %v1174 = vpop.permute.xlu0 %1173
    %v1177 = vsel %vm238, %v1171, 0
    %1179 = vmatpush.msra.mxu0 0.0
    %1180 = vmatpush.msra.mxu0 0.0
    %1181 = vmatpush.msra.mxu0 0.0
    %1182 = vmatpush.msra.mxu0 0.0
    %1183 = vmatpush.msra.mxu0 0.0
    %1184 = vmatpush.msra.mxu0 0.0
    %1185 = vmatpush.msra.mxu0 0.0
    %1186 = vmatpush.msra.mxu0 0.0
    %1187 = vmatpush.msra.mxu0 0.0
    %1188 = vmatpush.msra.mxu0 0.0
    %1189 = vmatpush.msra.mxu0 0.0
    %1190 = vmatpush.msra.mxu0 0.0
    %1191 = vmatpush.msra.mxu0 0.0
    %1192 = vmatpush.msra.mxu0 0.0
    %1193 = vmatpush.msra.mxu0 0.0
    %1194 = vmatpush.msra.mxu0 %v1174
    %1195 = vmatmul.f32.gmra.mxu0 %v1177
    %v1196 = vpop.f32.mrf.mxu0
    %v1197 = vadd.f32 0.0, %v1196
    %1198 = vdwg.mxu0
    %1199 = vrot.lane.b32.xlu0 %v959, 88
    %v1200 = vpop.permute.xlu0 %1199
    %v1203 = vsel %vm238, %v1172, 0
    %1205 = vmatpush.msra.mxu0 0.0
    %1206 = vmatpush.msra.mxu0 0.0
    %1207 = vmatpush.msra.mxu0 0.0
    %1208 = vmatpush.msra.mxu0 0.0
    %1209 = vmatpush.msra.mxu0 0.0
    %1210 = vmatpush.msra.mxu0 0.0
    %1211 = vmatpush.msra.mxu0 0.0
    %1212 = vmatpush.msra.mxu0 0.0
    %1213 = vmatpush.msra.mxu0 0.0
    %1214 = vmatpush.msra.mxu0 0.0
    %1215 = vmatpush.msra.mxu0 0.0
    %1216 = vmatpush.msra.mxu0 0.0
    %1217 = vmatpush.msra.mxu0 0.0
    %1218 = vmatpush.msra.mxu0 0.0
    %1219 = vmatpush.msra.mxu0 0.0
    %1220 = vmatpush.msra.mxu0 %v1200
    %1221 = vmatmul.f32.gmra.mxu0 %v1203
    %v1222 = vpop.f32.mrf.mxu0
    %v1223 = vadd.f32 0.0, %v1222
    %1224 = vdwg.mxu0
    %1225 = vrot.lane.b32.xlu0 %v961, 112
    %v1226 = vpop.permute.xlu0 %1225
    %1227 = vrot.lane.b32.xlu0 %v956, 112
    %v1228 = vpop.permute.xlu0 %1227
    %v1229 = vsel %vm238, %v1226, 0
    %v1231 = vsel %vm238, %v1228, 0
    %1233 = vmatpush.xpose.msra.mxu0 0.0
    %1234 = vmatpush.xpose.msra.mxu0 0.0
    %1235 = vmatpush.xpose.msra.mxu0 0.0
    %1236 = vmatpush.xpose.msra.mxu0 0.0
    %1237 = vmatpush.xpose.msra.mxu0 0.0
    %1238 = vmatpush.xpose.msra.mxu0 0.0
    %1239 = vmatpush.xpose.msra.mxu0 0.0
    %1240 = vmatpush.xpose.msra.mxu0 0.0
    %1241 = vmatpush.xpose.msra.mxu0 0.0
    %1242 = vmatpush.xpose.msra.mxu0 0.0
    %1243 = vmatpush.xpose.msra.mxu0 0.0
    %1244 = vmatpush.xpose.msra.mxu0 0.0
    %1245 = vmatpush.xpose.msra.mxu0 0.0
    %1246 = vmatpush.xpose.msra.mxu0 0.0
    %1247 = vmatpush.xpose.msra.mxu0 0.0
    %1248 = vmatpush.xpose.msra.mxu0 %v1231
    %1249 = vmatmul.f32.gmra.mxu0 %v1229
    %v1250 = vpop.f32.mrf.mxu0
    %v1251 = vadd.f32 %v965, %v1250
    %1252 = vdwg.mxu0
    %1253 = vrot.lane.b32.xlu0 %v962, 112
    %v1254 = vpop.permute.xlu0 %1253
    %1255 = vrot.lane.b32.xlu0 %v959, 112
    %v1256 = vpop.permute.xlu0 %1255
    %v1257 = vsel %vm238, %v1254, 0
    %v1259 = vsel %vm238, %v1256, 0
    %1261 = vmatpush.xpose.msra.mxu0 0.0
    %1262 = vmatpush.xpose.msra.mxu0 0.0
    %1263 = vmatpush.xpose.msra.mxu0 0.0
    %1264 = vmatpush.xpose.msra.mxu0 0.0
    %1265 = vmatpush.xpose.msra.mxu0 0.0
    %1266 = vmatpush.xpose.msra.mxu0 0.0
    %1267 = vmatpush.xpose.msra.mxu0 0.0
    %1268 = vmatpush.xpose.msra.mxu0 0.0
    %1269 = vmatpush.xpose.msra.mxu0 0.0
    %1270 = vmatpush.xpose.msra.mxu0 0.0
    %1271 = vmatpush.xpose.msra.mxu0 0.0
    %1272 = vmatpush.xpose.msra.mxu0 0.0
    %1273 = vmatpush.xpose.msra.mxu0 0.0
    %1274 = vmatpush.xpose.msra.mxu0 0.0
    %1275 = vmatpush.xpose.msra.mxu0 0.0
    %1276 = vmatpush.xpose.msra.mxu0 %v1259
    %1277 = vmatmul.f32.gmra.mxu0 %v1257
    %v1278 = vpop.f32.mrf.mxu0
    %v1279 = vadd.f32 %v966, %v1278
    %1280 = vdwg.mxu0
    %v1281 = vsel %vm238, %v1251, -inf
    %1282 = vmax.xlane.f32.xlu0 %v1281
    %v1283 = vpop.xlane.xlu0 %1282
    %v1284 = vsel %vm238, %v1279, -inf
    %1285 = vmax.xlane.f32.xlu0 %v1284
    %v1286 = vpop.xlane.xlu0 %1285
    %v1287 = vsub.f32 %v1251, %v1283
    %v1288 = vsub.f32 %v1279, %v1286
    %v1289 = vmul.f32 %v1287, 1.442695
    %v1290 = vpow.pop %v1289
    %v1291 = vmul.f32 %v1288, 1.442695
    %v1292 = vpow.pop %v1291
    %v1293 = vsel %vm238, %v1290, 0.0
    %1294 = vadd.xlane.f32.xlu0 %v1293
    %v1295 = vpop.xlane.xlu0 %1294
    %v1296 = vsel %vm238, %v1292, 0.0
    %1297 = vadd.xlane.f32.xlu0 %v1296
    %v1298 = vpop.xlane.xlu0 %1297
    %v1299 = vrcp.pop %v1295
    %v1300 = vrcp.pop %v1298
    %v1301 = vmul.f32 %v1290, %v1299
    %v1302 = vmul.f32 %v1292, %v1300
    %1303 = vrot.lane.b32.xlu0 %v956, 80
    %v1304 = vpop.permute.xlu0 %1303
    %v1307 = vsel %vm238, %v1301, 0
    %1309 = vmatpush.msra.mxu0 0.0
    %1310 = vmatpush.msra.mxu0 0.0
    %1311 = vmatpush.msra.mxu0 0.0
    %1312 = vmatpush.msra.mxu0 0.0
    %1313 = vmatpush.msra.mxu0 0.0
    %1314 = vmatpush.msra.mxu0 0.0
    %1315 = vmatpush.msra.mxu0 0.0
    %1316 = vmatpush.msra.mxu0 0.0
    %1317 = vmatpush.msra.mxu0 0.0
    %1318 = vmatpush.msra.mxu0 0.0
    %1319 = vmatpush.msra.mxu0 0.0
    %1320 = vmatpush.msra.mxu0 0.0
    %1321 = vmatpush.msra.mxu0 0.0
    %1322 = vmatpush.msra.mxu0 0.0
    %1323 = vmatpush.msra.mxu0 0.0
    %1324 = vmatpush.msra.mxu0 %v1304
    %1325 = vmatmul.f32.gmra.mxu0 %v1307
    %v1326 = vpop.f32.mrf.mxu0
    %v1327 = vadd.f32 0.0, %v1326
    %1328 = vdwg.mxu0
    %1329 = vrot.lane.b32.xlu0 %v959, 80
    %v1330 = vpop.permute.xlu0 %1329
    %v1333 = vsel %vm238, %v1302, 0
    %1335 = vmatpush.msra.mxu0 0.0
    %1336 = vmatpush.msra.mxu0 0.0
    %1337 = vmatpush.msra.mxu0 0.0
    %1338 = vmatpush.msra.mxu0 0.0
    %1339 = vmatpush.msra.mxu0 0.0
    %1340 = vmatpush.msra.mxu0 0.0
    %1341 = vmatpush.msra.mxu0 0.0
    %1342 = vmatpush.msra.mxu0 0.0
    %1343 = vmatpush.msra.mxu0 0.0
    %1344 = vmatpush.msra.mxu0 0.0
    %1345 = vmatpush.msra.mxu0 0.0
    %1346 = vmatpush.msra.mxu0 0.0
    %1347 = vmatpush.msra.mxu0 0.0
    %1348 = vmatpush.msra.mxu0 0.0
    %1349 = vmatpush.msra.mxu0 0.0
    %1350 = vmatpush.msra.mxu0 %v1330
    %1351 = vmatmul.f32.gmra.mxu0 %v1333
    %v1352 = vpop.f32.mrf.mxu0
    %v1353 = vadd.f32 0.0, %v1352
    %1354 = vdwg.mxu0
    %1355 = vrot.lane.b32.xlu0 %v961, 104
    %v1356 = vpop.permute.xlu0 %1355
    %1357 = vrot.lane.b32.xlu0 %v956, 104
    %v1358 = vpop.permute.xlu0 %1357
    %v1359 = vsel %vm238, %v1356, 0
    %v1361 = vsel %vm238, %v1358, 0
    %1363 = vmatpush.xpose.msra.mxu0 0.0
    %1364 = vmatpush.xpose.msra.mxu0 0.0
    %1365 = vmatpush.xpose.msra.mxu0 0.0
    %1366 = vmatpush.xpose.msra.mxu0 0.0
    %1367 = vmatpush.xpose.msra.mxu0 0.0
    %1368 = vmatpush.xpose.msra.mxu0 0.0
    %1369 = vmatpush.xpose.msra.mxu0 0.0
    %1370 = vmatpush.xpose.msra.mxu0 0.0
    %1371 = vmatpush.xpose.msra.mxu0 0.0
    %1372 = vmatpush.xpose.msra.mxu0 0.0
    %1373 = vmatpush.xpose.msra.mxu0 0.0
    %1374 = vmatpush.xpose.msra.mxu0 0.0
    %1375 = vmatpush.xpose.msra.mxu0 0.0
    %1376 = vmatpush.xpose.msra.mxu0 0.0
    %1377 = vmatpush.xpose.msra.mxu0 0.0
    %1378 = vmatpush.xpose.msra.mxu0 %v1361
    %1379 = vmatmul.f32.gmra.mxu0 %v1359
    %v1380 = vpop.f32.mrf.mxu0
    %v1381 = vadd.f32 %v965, %v1380
    %1382 = vdwg.mxu0
    %1383 = vrot.lane.b32.xlu0 %v962, 104
    %v1384 = vpop.permute.xlu0 %1383
    %1385 = vrot.lane.b32.xlu0 %v959, 104
    %v1386 = vpop.permute.xlu0 %1385
    %v1387 = vsel %vm238, %v1384, 0
    %v1389 = vsel %vm238, %v1386, 0
    %1391 = vmatpush.xpose.msra.mxu0 0.0
    %1392 = vmatpush.xpose.msra.mxu0 0.0
    %1393 = vmatpush.xpose.msra.mxu0 0.0
    %1394 = vmatpush.xpose.msra.mxu0 0.0
    %1395 = vmatpush.xpose.msra.mxu0 0.0
    %1396 = vmatpush.xpose.msra.mxu0 0.0
    %1397 = vmatpush.xpose.msra.mxu0 0.0
    %1398 = vmatpush.xpose.msra.mxu0 0.0
    %1399 = vmatpush.xpose.msra.mxu0 0.0
    %1400 = vmatpush.xpose.msra.mxu0 0.0
    %1401 = vmatpush.xpose.msra.mxu0 0.0
    %1402 = vmatpush.xpose.msra.mxu0 0.0
    %1403 = vmatpush.xpose.msra.mxu0 0.0
    %1404 = vmatpush.xpose.msra.mxu0 0.0
    %1405 = vmatpush.xpose.msra.mxu0 0.0
    %1406 = vmatpush.xpose.msra.mxu0 %v1389
    %1407 = vmatmul.f32.gmra.mxu0 %v1387
    %v1408 = vpop.f32.mrf.mxu0
    %v1409 = vadd.f32 %v966, %v1408
    %1410 = vdwg.mxu0
    %v1411 = vsel %vm238, %v1381, -inf
    %1412 = vmax.xlane.f32.xlu0 %v1411
    %v1413 = vpop.xlane.xlu0 %1412
    %v1414 = vsel %vm238, %v1409, -inf
    %1415 = vmax.xlane.f32.xlu0 %v1414
    %v1416 = vpop.xlane.xlu0 %1415
    %v1417 = vsub.f32 %v1381, %v1413
    %v1418 = vsub.f32 %v1409, %v1416
    %v1419 = vmul.f32 %v1417, 1.442695
    %v1420 = vpow.pop %v1419
    %v1421 = vmul.f32 %v1418, 1.442695
    %v1422 = vpow.pop %v1421
    %v1423 = vsel %vm238, %v1420, 0.0
    %1424 = vadd.xlane.f32.xlu0 %v1423
    %v1425 = vpop.xlane.xlu0 %1424
    %v1426 = vsel %vm238, %v1422, 0.0
    %1427 = vadd.xlane.f32.xlu0 %v1426
    %v1428 = vpop.xlane.xlu0 %1427
    %v1429 = vrcp.pop %v1425
    %v1430 = vrcp.pop %v1428
    %v1431 = vmul.f32 %v1420, %v1429
    %v1432 = vmul.f32 %v1422, %v1430
    %1433 = vrot.lane.b32.xlu0 %v956, 72
    %v1434 = vpop.permute.xlu0 %1433
    %v1437 = vsel %vm238, %v1431, 0
    %1439 = vmatpush.msra.mxu0 0.0
    %1440 = vmatpush.msra.mxu0 0.0
    %1441 = vmatpush.msra.mxu0 0.0
    %1442 = vmatpush.msra.mxu0 0.0
    %1443 = vmatpush.msra.mxu0 0.0
    %1444 = vmatpush.msra.mxu0 0.0
    %1445 = vmatpush.msra.mxu0 0.0
    %1446 = vmatpush.msra.mxu0 0.0
    %1447 = vmatpush.msra.mxu0 0.0
    %1448 = vmatpush.msra.mxu0 0.0
    %1449 = vmatpush.msra.mxu0 0.0
    %1450 = vmatpush.msra.mxu0 0.0
    %1451 = vmatpush.msra.mxu0 0.0
    %1452 = vmatpush.msra.mxu0 0.0
    %1453 = vmatpush.msra.mxu0 0.0
    %1454 = vmatpush.msra.mxu0 %v1434
    %1455 = vmatmul.f32.gmra.mxu0 %v1437
    %v1456 = vpop.f32.mrf.mxu0
    %v1457 = vadd.f32 0.0, %v1456
    %1458 = vdwg.mxu0
    %1459 = vrot.lane.b32.xlu0 %v959, 72
    %v1460 = vpop.permute.xlu0 %1459
    %v1463 = vsel %vm238, %v1432, 0
    %1465 = vmatpush.msra.mxu0 0.0
    %1466 = vmatpush.msra.mxu0 0.0
    %1467 = vmatpush.msra.mxu0 0.0
    %1468 = vmatpush.msra.mxu0 0.0
    %1469 = vmatpush.msra.mxu0 0.0
    %1470 = vmatpush.msra.mxu0 0.0
    %1471 = vmatpush.msra.mxu0 0.0
    %1472 = vmatpush.msra.mxu0 0.0
    %1473 = vmatpush.msra.mxu0 0.0
    %1474 = vmatpush.msra.mxu0 0.0
    %1475 = vmatpush.msra.mxu0 0.0
    %1476 = vmatpush.msra.mxu0 0.0
    %1477 = vmatpush.msra.mxu0 0.0
    %1478 = vmatpush.msra.mxu0 0.0
    %1479 = vmatpush.msra.mxu0 0.0
    %1480 = vmatpush.msra.mxu0 %v1460
    %1481 = vmatmul.f32.gmra.mxu0 %v1463
    %v1482 = vpop.f32.mrf.mxu0
    %v1483 = vadd.f32 0.0, %v1482
    %1484 = vdwg.mxu0
    %1487 = vrot.lane.b32.xlu0 %v1197, 8
    %v1488 = vpop.permute.xlu0 %1487
    %1489 = vrot.lane.b32.xlu0 %v1223, 8
    %v1490 = vpop.permute.xlu0 %1489
    %1495 = vrot.lane.b32.xlu0 %v1327, 16
    %v1496 = vpop.permute.xlu0 %1495
    %1497 = vrot.lane.b32.xlu0 %v1353, 16
    %v1498 = vpop.permute.xlu0 %1497
    %1503 = vrot.lane.b32.xlu0 %v1457, 24
    %v1504 = vpop.permute.xlu0 %1503
    %1505 = vrot.lane.b32.xlu0 %v1483, 24
    %v1506 = vpop.permute.xlu0 %1505
    %v1509 = vsel %vm238, %v1067, %v1488
    %v1510 = vsel %vm238, %v1093, %v1490
    %v1511 = vsel %vm782, %v1509, %v1496
    %v1512 = vsel %vm782, %v1510, %v1498
    %v1513 = vsel %vm785, %v1511, %v1504
    %v1514 = vsel %vm785, %v1512, %v1506
    %v1515 = vld [vmem:[#allocation11] sm:$0xff]
    %v1516 = vld [vmem:[#allocation11 + $0x8] sm:$0xff]
    %v1517 = vld [vmem:[#allocation11 + $0x10] sm:$0xff]
    %v1518 = vld [vmem:[#allocation11 + $0x18] sm:$0xff]
    %v1519 = vld [vmem:[%s15] sm:$0x1]
    %v1521 = vperm.slane %v1519, 0
    %v1524 = vsel %vm203, %v1513, 0
    %v1527 = vsel %vm203, %v1514, 0
    %1529 = vmatpush.msra.mxu0 0.0
    %1530 = vmatpush.msra.mxu0 0.0
    %1531 = vmatpush.msra.mxu0 0.0
    %1532 = vmatpush.msra.mxu0 0.0
    %1533 = vmatpush.msra.mxu0 0.0
    %1534 = vmatpush.msra.mxu0 0.0
    %1535 = vmatpush.msra.mxu0 0.0
    %1536 = vmatpush.msra.mxu0 0.0
    %1537 = vmatpush.msra.mxu0 0.0
    %1538 = vmatpush.msra.mxu0 0.0
    %1539 = vmatpush.msra.mxu0 0.0
    %1540 = vmatpush.msra.mxu0 0.0
    %1541 = vmatpush.msra.mxu0 %v1518
    %1542 = vmatpush.msra.mxu0 %v1517
    %1543 = vmatpush.msra.mxu0 %v1516
    %1544 = vmatpush.msra.mxu0 %v1515
    %1545 = vmatmul.f32.gmra.mxu0 %v1524
    %v1546 = vpop.f32.mrf.mxu0
    %v1547 = vadd.f32 %v1521, %v1546
    %1548 = vmatmul.f32.gmra.mxu0 %v1527
    %v1549 = vpop.f32.mrf.mxu0
    %v1550 = vadd.f32 %v1521, %v1549
    %1551 = vdwg.mxu0
    %v1552 = vadd.f32 %v885, %v1547
    %v1553 = vadd.f32 %v886, %v1550
    %v1554 = vsel %vm203, %v1552, 0.0
    %1555 = vadd.xlane.f32.xlu0 %v1554
    %v1556 = vpop.xlane.xlu0 %1555
    %v1557 = vsel %vm203, %v1553, 0.0
    %1558 = vadd.xlane.f32.xlu0 %v1557
    %v1559 = vpop.xlane.xlu0 %1558
    %v1560 = vmul.f32 %v1552, %v1552
    %v1561 = vmul.f32 %v1553, %v1553
    %v1562 = vsel %vm203, %v1560, 0.0
    %1563 = vadd.xlane.f32.xlu0 %v1562
    %v1564 = vpop.xlane.xlu0 %1563
    %v1565 = vsel %vm203, %v1561, 0.0
    %1566 = vadd.xlane.f32.xlu0 %v1565
    %v1567 = vpop.xlane.xlu0 %1566
    %v1568 = vmul.f32 %v1556, 0.03125
    %v1569 = vmul.f32 %v1559, 0.03125
    %v1570 = vmul.f32 %v1564, 0.03125
    %v1571 = vmul.f32 %v1567, 0.03125
    %v1572 = vmul.f32 %v1568, %v1568
    %v1573 = vmul.f32 %v1569, %v1569
    %v1574 = vsub.f32 %v1570, %v1572
    %v1575 = vsub.f32 %v1571, %v1573
    %v1576 = vsub.f32 %v1552, %v1568
    %v1577 = vsub.f32 %v1553, %v1569
    %v1578 = vadd.f32 %v1574, 1e-05
    %v1579 = vadd.f32 %v1575, 1e-05
    %v1580 = vrsqrt.pop %v1578
    %v1581 = vmul.f32 %v1580, %v1578
    %v1582 = vmul.f32 %v1581, %v1580
    %v1583 = vmul.f32 0.5, %v1582
    %v1584 = vsub.f32 1.5, %v1583
    %v1585 = vmul.f32 %v1580, %v1584
    %vm1586 = vweird.f32 %v1578
    %vm1587 = vweird.f32 %v1580
    %vm1588 = vmor %vm1586, %vm1587
    %v1589 = vsel %vm1588, %v1580, %v1585
    %v1590 = vrsqrt.pop %v1579
    %v1591 = vmul.f32 %v1590, %v1579
    %v1592 = vmul.f32 %v1591, %v1590
    %v1593 = vmul.f32 0.5, %v1592
    %v1594 = vsub.f32 1.5, %v1593
    %v1595 = vmul.f32 %v1590, %v1594
    %vm1596 = vweird.f32 %v1579
    %vm1597 = vweird.f32 %v1590
    %vm1598 = vmor %vm1596, %vm1597
    %v1599 = vsel %vm1598, %v1590, %v1595
    %v1600 = vmul.f32 %v1576, %v1589
    %v1601 = vmul.f32 %v1577, %v1599
    %v1602 = vld [vmem:[%s16] sm:$0x1]
    %v1604 = vperm.slane %v1602, 0
    %v1606 = vmul.f32 %v1600, %v1604
    %v1607 = vmul.f32 %v1601, %v1604
    %v1608 = vld [vmem:[%s17] sm:$0x1]
    %v1610 = vperm.slane %v1608, 0
    %v1612 = vadd.f32 %v1606, %v1610
    %v1613 = vadd.f32 %v1607, %v1610
    %v1614 = vld [vmem:[#allocation13] sm:$0xff]
    %v1615 = vld [vmem:[#allocation13 + $0x8] sm:$0xff]
    %v1616 = vld [vmem:[#allocation13 + $0x10] sm:$0xff]
    %v1617 = vld [vmem:[#allocation13 + $0x18] sm:$0xff]
    %v1618 = vld [vmem:[%s19] sm:$0x1]
    %v1620 = vperm.slane %v1618, 0
    %v1623 = vsel %vm203, %v1612, 0
    %v1626 = vsel %vm203, %v1613, 0
    %1628 = vmatpush.msra.mxu0 0.0
    %1629 = vmatpush.msra.mxu0 0.0
    %1630 = vmatpush.msra.mxu0 0.0
    %1631 = vmatpush.msra.mxu0 0.0
    %1632 = vmatpush.msra.mxu0 0.0
    %1633 = vmatpush.msra.mxu0 0.0
    %1634 = vmatpush.msra.mxu0 0.0
    %1635 = vmatpush.msra.mxu0 0.0
    %1636 = vmatpush.msra.mxu0 0.0
    %1637 = vmatpush.msra.mxu0 0.0
    %1638 = vmatpush.msra.mxu0 0.0
    %1639 = vmatpush.msra.mxu0 0.0
    %1640 = vmatpush.msra.mxu0 %v1617
    %1641 = vmatpush.msra.mxu0 %v1616
    %1642 = vmatpush.msra.mxu0 %v1615
    %1643 = vmatpush.msra.mxu0 %v1614
    %1644 = vmatmul.f32.gmra.mxu0 %v1623
    %v1645 = vpop.f32.mrf.mxu0
    %v1646 = vadd.f32 %v1620, %v1645
    %1647 = vmatmul.f32.gmra.mxu0 %v1626
    %v1648 = vpop.f32.mrf.mxu0
    %v1649 = vadd.f32 %v1620, %v1648
    %1650 = vdwg.mxu0
    %v1651 = vmax.f32 %v1646, 0.0
    %v1652 = vmax.f32 %v1649, 0.0
    %v1653 = vld [vmem:[%s20] sm:$0xff]
    %v1654 = vld [vmem:[%s20 + $0x8] sm:$0xff]
    %v1655 = vld [vmem:[%s20 + $0x10] sm:$0xff]
    %v1656 = vld [vmem:[%s20 + $0x18] sm:$0xff]
    %v1657 = vld [vmem:[%s20 + $0x20] sm:$0xff]
    %v1658 = vld [vmem:[%s20 + $0x28] sm:$0xff]
    %v1659 = vld [vmem:[%s20 + $0x30] sm:$0xff]
    %v1660 = vld [vmem:[%s20 + $0x38] sm:$0xff]
    %v1661 = vld [vmem:[%s21] sm:$0x1]
    %v1663 = vperm.slane %v1661, 0
    %vm1665 = vcmask 523264
    %v1667 = vsel %vm1665, %v1651, 0
    %v1670 = vsel %vm1665, %v1652, 0
    %1672 = vmatpush.msra.mxu0 0.0
    %1673 = vmatpush.msra.mxu0 0.0
    %1674 = vmatpush.msra.mxu0 0.0
    %1675 = vmatpush.msra.mxu0 0.0
    %1676 = vmatpush.msra.mxu0 0.0
    %1677 = vmatpush.msra.mxu0 0.0
    %1678 = vmatpush.msra.mxu0 0.0
    %1679 = vmatpush.msra.mxu0 0.0
    %1680 = vmatpush.msra.mxu0 %v1660
    %1681 = vmatpush.msra.mxu0 %v1659
    %1682 = vmatpush.msra.mxu0 %v1658
    %1683 = vmatpush.msra.mxu0 %v1657
    %1684 = vmatpush.msra.mxu0 %v1656
    %1685 = vmatpush.msra.mxu0 %v1655
    %1686 = vmatpush.msra.mxu0 %v1654
    %1687 = vmatpush.msra.mxu0 %v1653
    %1688 = vmatmul.f32.gmra.mxu0 %v1667
    %v1689 = vpop.f32.mrf.mxu0
    %v1690 = vadd.f32 %v1663, %v1689
    %1691 = vmatmul.f32.gmra.mxu0 %v1670
    %v1692 = vpop.f32.mrf.mxu0
    %v1693 = vadd.f32 %v1663, %v1692
    %1694 = vdwg.mxu0
    %v1695 = vadd.f32 %v1612, %v1690
    %v1696 = vadd.f32 %v1613, %v1693
    %v1697 = vsel %vm203, %v1695, 0.0
    %1698 = vadd.xlane.f32.xlu0 %v1697
    %v1699 = vpop.xlane.xlu0 %1698
    %v1700 = vsel %vm203, %v1696, 0.0
    %1701 = vadd.xlane.f32.xlu0 %v1700
    %v1702 = vpop.xlane.xlu0 %1701
    %v1703 = vmul.f32 %v1695, %v1695
    %v1704 = vmul.f32 %v1696, %v1696
    %v1705 = vsel %vm203, %v1703, 0.0
    %1706 = vadd.xlane.f32.xlu0 %v1705
    %v1707 = vpop.xlane.xlu0 %1706
    %v1708 = vsel %vm203, %v1704, 0.0
    %1709 = vadd.xlane.f32.xlu0 %v1708
    %v1710 = vpop.xlane.xlu0 %1709
    %v1711 = vmul.f32 %v1699, 0.03125
    %v1712 = vmul.f32 %v1702, 0.03125
    %v1713 = vmul.f32 %v1707, 0.03125
    %v1714 = vmul.f32 %v1710, 0.03125
    %v1715 = vmul.f32 %v1711, %v1711
    %v1716 = vmul.f32 %v1712, %v1712
    %v1717 = vsub.f32 %v1713, %v1715
    %v1718 = vsub.f32 %v1714, %v1716
    %v1719 = vsub.f32 %v1695, %v1711
    %v1720 = vsub.f32 %v1696, %v1712
    %v1721 = vadd.f32 %v1717, 1e-05
    %v1722 = vadd.f32 %v1718, 1e-05
    %v1723 = vrsqrt.pop %v1721
    %v1724 = vmul.f32 %v1723, %v1721
    %v1725 = vmul.f32 %v1724, %v1723
    %v1726 = vmul.f32 0.5, %v1725
    %v1727 = vsub.f32 1.5, %v1726
    %v1728 = vmul.f32 %v1723, %v1727
    %vm1729 = vweird.f32 %v1721
    %vm1730 = vweird.f32 %v1723
    %vm1731 = vmor %vm1729, %vm1730
    %v1732 = vsel %vm1731, %v1723, %v1728
    %v1733 = vrsqrt.pop %v1722
    %v1734 = vmul.f32 %v1733, %v1722
    %v1735 = vmul.f32 %v1734, %v1733
    %v1736 = vmul.f32 0.5, %v1735
    %v1737 = vsub.f32 1.5, %v1736
    %v1738 = vmul.f32 %v1733, %v1737
    %vm1739 = vweird.f32 %v1722
    %vm1740 = vweird.f32 %v1733
    %vm1741 = vmor %vm1739, %vm1740
    %v1742 = vsel %vm1741, %v1733, %v1738
    %v1743 = vmul.f32 %v1719, %v1732
    %v1744 = vmul.f32 %v1720, %v1742
    %v1745 = vld [vmem:[%s22] sm:$0x1]
    %v1747 = vperm.slane %v1745, 0
    %v1749 = vmul.f32 %v1743, %v1747
    %v1750 = vmul.f32 %v1744, %v1747
    %v1751 = vld [vmem:[%s23] sm:$0x1]
    %v1753 = vperm.slane %v1751, 0
    %v1755 = vadd.f32 %v1749, %v1753
    %v1756 = vadd.f32 %v1750, %v1753
    %1757 = vst.msk [vmem:[#allocation14] sm:$0xff] %vm203, %v1755
    %1758 = vst.msk [vmem:[#allocation14 + $0x8] sm:$0xff] %vm203, %v1756
    // Predicated region
    $region126: #{tpu_custom_call.1} parent=1 // pred_check
      _
    $region127: #{tpu_custom_call.1} parent=1 // pred_check_branch
      %1760 = sbr.rel (0) target = $region129
    $region128: #{tpu_custom_call.1} parent=1 // pred_region
      %1762 = vsyncadd [#allocation4], 0
      %s1763 = sshll.u32 [#allocation14], 4
      %s1764 = int_to_ptr.vmem [resolvable:$true] %s1763
      %s1765 = sshll.u32 %s24, 4
      %s1766 = int_to_ptr.hbm [resolvable:$true] %s1765
      %1771 = dma.vmem_to_hbm [thread:$0]  %s1764, 256, %s1766, [#allocation4], 128, 128, 8
    $region129: #{tpu_custom_call.1} parent=1 // pred_fallthru
      _
    // Predicated region
    $region130: #{tpu_custom_call.1} parent=1 // pred_check
      _
    $region131: #{tpu_custom_call.1} parent=1 // pred_check_branch
      %1773 = sbr.rel (0) target = $region133
    $region132: #{tpu_custom_call.1} parent=1 // pred_region
      %1775 = dma.done [#allocation4], 256
    $region133: #{tpu_custom_call.1} parent=1 // pred_fallthru
      _
    %1776 = vsyncpa [#allocation3], 1
    %1777 = vsyncpa [#allocation6], 1
    %1778 = vsyncpa [#allocation9], 1
    %1779 = vsyncpa [#allocation12], 1
    %1780 = vsyncpa [#allocation4], 1

</llo_original>
